<compile_context>
chip_gen: v7x
topology: tpu7x:2x2x1
jax: 0.10.0
libtpu: 0.0.40
codegen_flags: <defaults>
</compile_context>

<pallas_src>
import functools

import jax
import jax.numpy as jnp
from jax import lax
from jax.experimental import pallas as pl
from jax.experimental.pallas import tpu as pltpu

KSIZE = 4    # kernel_size
STRIDE = 2
PAD = 1


# ----------------------------------------------------------------------------
# Pallas kernel: one batch element per grid step.
#   ph_ref : (4, Hh, Wh, Cin)  f32   4 stride-2 phase images of the padded input
#   w_ref  : (16, Cin, Cout)   bf16  per-tap weight slices, tap index = ky*4+kx
#   b_ref  : (1, Cout)         f32
#   o_ref  : (Ho*Wo, Cout)     f32
# Accumulates 16 tap-matmuls (im2col fused in VMEM) on top of the bias.
# ----------------------------------------------------------------------------
def _downsample_kernel(ph_ref, w_ref, b_ref, o_ref, *, ho, wo, cin, cout):
    # start from the bias (broadcast once, hoisted out of the tap loop)
    acc = jnp.broadcast_to(b_ref[...], (ho * wo, cout)).astype(jnp.float32)

    # fully static, unrolled tap loop: 16 small MXU matmuls, f32 accumulation
    for p in range(4):                      # phase = (row parity, col parity)
        py, px = p // 2, p % 2
        for r0 in range(2):                 # row offset inside the phase image
            for c0 in range(2):             # col offset inside the phase image
                ky = 2 * r0 + py
                kx = 2 * c0 + px
                # contiguous static slice -> (Ho, Wo, Cin) tap patch (VMEM only)
                tile = ph_ref[p, r0:r0 + ho, c0:c0 + wo, :]
                lhs = tile.reshape(ho * wo, cin).astype(jnp.bfloat16)
                acc += jnp.dot(lhs, w_ref[ky * KSIZE + kx],
                               preferred_element_type=jnp.float32)

    o_ref[...] = acc


# ----------------------------------------------------------------------------
# Wrapper: NCHW in / NCHW out, PyTorch Conv2d(k=4, s=2, p=1) semantics.
# ----------------------------------------------------------------------------
def downsample_sr(x_nchw, weight_oihw, bias):
    B, Cin, H, W = x_nchw.shape
    Cout = weight_oihw.shape[0]
    assert weight_oihw.shape == (Cout, Cin, KSIZE, KSIZE)
    Hp, Wp = H + 2 * PAD, W + 2 * PAD
    assert Hp % 2 == 0 and Wp % 2 == 0, "phase decomposition needs even H, W"
    Ho = (Hp - KSIZE) // STRIDE + 1
    Wo = (Wp - KSIZE) // STRIDE + 1
    Hh, Wh = Hp // 2, Wp // 2

    # NHWC + zero pad, then split into the 4 stride-2 phase images:
    #   phases[b*4 + 2*py + px, u, v, c] = xpad[b, 2u+py, 2v+px, c]
    x = jnp.transpose(x_nchw, (0, 2, 3, 1))
    xp = jnp.pad(x, ((0, 0), (PAD, PAD), (PAD, PAD), (0, 0)))
    phases = xp.reshape(B, Hh, 2, Wh, 2, Cin)
    phases = jnp.transpose(phases, (0, 2, 4, 1, 3, 5)).reshape(B * 4, Hh, Wh, Cin)
    phases = phases.astype(jnp.float32)

    # per-tap weight slices, stored bf16 (MXU-native), f32 accumulation in-kernel
    w_taps = jnp.transpose(weight_oihw, (2, 3, 1, 0)).reshape(
        KSIZE * KSIZE, Cin, Cout).astype(jnp.bfloat16)
    b2 = bias.reshape(1, Cout).astype(jnp.float32)

    kernel = functools.partial(_downsample_kernel, ho=Ho, wo=Wo, cin=Cin, cout=Cout)
    out = pl.pallas_call(
        kernel,
        out_shape=jax.ShapeDtypeStruct((B * Ho * Wo, Cout), jnp.float32),
        grid=(B,),
        in_specs=[
            # 4 phase images of batch element b
            pl.BlockSpec((4, Hh, Wh, Cin), lambda b: (b, 0, 0, 0)),
            # weights / bias: constant block index -> resident, fetched once
            pl.BlockSpec((KSIZE * KSIZE, Cin, Cout), lambda b: (0, 0, 0)),
            pl.BlockSpec((1, Cout), lambda b: (0, 0)),
        ],
        out_specs=pl.BlockSpec((Ho * Wo, Cout), lambda b: (b, 0)),
        compiler_params=pltpu.CompilerParams(
            dimension_semantics=("parallel",)),
    )(phases, w_taps, b2)

    out = out.reshape(B, Ho, Wo, Cout)
    return jnp.transpose(out, (0, 3, 1, 2))   # back to NCHW


# ----------------------------------------------------------------------------
# Pure-JAX reference (same bf16 operand rounding as the kernel, f32 accumulate)
# ----------------------------------------------------------------------------
def reference(x_nchw, weight_oihw, bias):
    xq = x_nchw.astype(jnp.bfloat16).astype(jnp.float32)
    wq = weight_oihw.astype(jnp.bfloat16).astype(jnp.float32)
    out = lax.conv_general_dilated(
        xq, wq, window_strides=(STRIDE, STRIDE),
        padding=((PAD, PAD), (PAD, PAD)),
        dimension_numbers=("NCHW", "OIHW", "NCHW"),
        precision=lax.Precision.HIGHEST)
    return out + bias.reshape(1, -1, 1, 1)


if __name__ == "__main__":
    key = jax.random.PRNGKey(0)
    kx_, kw_, kb_ = jax.random.split(key, 3)

    B, CIN, H, W = 2, 4, 16, 16     # small shapes consistent with the module
    COUT = 32
    x = jax.random.normal(kx_, (B, CIN, H, W), jnp.float32)
    w = jax.random.normal(kw_, (COUT, CIN, KSIZE, KSIZE), jnp.float32) / jnp.sqrt(
        float(CIN * KSIZE * KSIZE))
    b = 0.1 * jax.random.normal(kb_, (COUT,), jnp.float32)

    fwd = jax.jit(downsample_sr)
    out = fwd(x, w, b)
    jax.block_until_ready(out)

    assert out.shape == (B, COUT, H // 2, W // 2), out.shape
    assert bool(jnp.all(jnp.isfinite(out)))
    ref = reference(x, w, b)
    err = float(jnp.max(jnp.abs(out - ref)))
    assert bool(jnp.allclose(out, ref, atol=5e-3, rtol=5e-3)), err
    print("KERNEL_OK")
</pallas_src>

<mosaic_0001>
module attributes {stable_mosaic.version = 11 : i64} {
  func.func @_downsample_kernel(%arg0: i32, %arg1: memref<4x9x9x4xf32, #tpu.memory_space<vmem>>, %arg2: memref<16x4x32xbf16, #tpu.memory_space<vmem>>, %arg3: memref<1x32xf32, #tpu.memory_space<vmem>>, %arg4: memref<64x32xf32, #tpu.memory_space<vmem>>) attributes {dimension_semantics = [#tpu.dimension_semantics<parallel>], iteration_bounds = array<i64: 2>, scalar_prefetch = 0 : i64, scratch_operands = 0 : i64, tpu.core_type = #tpu.core_type<tc>, window_params = [{transform_indices = @transform_0, window_bounds = array<i64: 4, 9, 9, 4>}, {pipeline_mode = #tpu.pipeline_mode<synchronous>, transform_indices = @transform_1, window_bounds = array<i64: 16, 4, 32>}, {pipeline_mode = #tpu.pipeline_mode<synchronous>, transform_indices = @transform_2, window_bounds = array<i64: 1, 32>}, {transform_indices = @transform_3, window_bounds = array<i64: 64, 32>}]} {
    %c0 = arith.constant 0 : index
    %c0_0 = arith.constant 0 : index
    %0 = vector.load %arg3[%c0, %c0_0] : memref<1x32xf32, #tpu.memory_space<vmem>>, vector<1x32xf32>
    %1 = vector.shape_cast %0 : vector<1x32xf32> to vector<1x32xf32>
    %2 = vector.broadcast %1 : vector<1x32xf32> to vector<64x32xf32>
    %c0_1 = arith.constant 0 : index
    %c0_2 = arith.constant 0 : index
    %c0_3 = arith.constant 0 : index
    %c0_4 = arith.constant 0 : index
    %3 = vector.load %arg1[%c0_1, %c0_2, %c0_3, %c0_4] : memref<4x9x9x4xf32, #tpu.memory_space<vmem>>, vector<1x8x8x4xf32>
    %4 = vector.shape_cast %3 : vector<1x8x8x4xf32> to vector<8x8x4xf32>
    %5 = vector.shape_cast %4 : vector<8x8x4xf32> to vector<64x4xf32>
    %6 = arith.truncf %5 : vector<64x4xf32> to vector<64x4xbf16>
    %c0_5 = arith.constant 0 : index
    %c0_6 = arith.constant 0 : index
    %c0_7 = arith.constant 0 : index
    %7 = vector.load %arg2[%c0_5, %c0_6, %c0_7] : memref<16x4x32xbf16, #tpu.memory_space<vmem>>, vector<1x4x32xbf16>
    %8 = vector.shape_cast %7 : vector<1x4x32xbf16> to vector<4x32xbf16>
    %cst = arith.constant dense<0.000000e+00> : vector<64x32xf32>
    %9 = tpu.matmul %6, %8, %cst {dimension_numbers = #tpu.dot_dimension_numbers<[1], [0], [0], [1], [0, 0, 1, 1], [], []>} : vector<64x4xbf16>, vector<4x32xbf16>, vector<64x32xf32> -> vector<64x32xf32>
    %10 = arith.addf %2, %9 : vector<64x32xf32>
    %c0_8 = arith.constant 0 : index
    %c0_9 = arith.constant 0 : index
    %c1 = arith.constant 1 : index
    %c0_10 = arith.constant 0 : index
    %11 = vector.load %arg1[%c0_8, %c0_9, %c1, %c0_10] : memref<4x9x9x4xf32, #tpu.memory_space<vmem>>, vector<1x8x8x4xf32>
    %12 = vector.shape_cast %11 : vector<1x8x8x4xf32> to vector<8x8x4xf32>
    %13 = vector.shape_cast %12 : vector<8x8x4xf32> to vector<64x4xf32>
    %14 = arith.truncf %13 : vector<64x4xf32> to vector<64x4xbf16>
    %c2 = arith.constant 2 : index
    %c0_11 = arith.constant 0 : index
    %c0_12 = arith.constant 0 : index
    %15 = vector.load %arg2[%c2, %c0_11, %c0_12] : memref<16x4x32xbf16, #tpu.memory_space<vmem>>, vector<1x4x32xbf16>
    %16 = vector.shape_cast %15 : vector<1x4x32xbf16> to vector<4x32xbf16>
    %cst_13 = arith.constant dense<0.000000e+00> : vector<64x32xf32>
    %17 = tpu.matmul %14, %16, %cst_13 {dimension_numbers = #tpu.dot_dimension_numbers<[1], [0], [0], [1], [0, 0, 1, 1], [], []>} : vector<64x4xbf16>, vector<4x32xbf16>, vector<64x32xf32> -> vector<64x32xf32>
    %18 = arith.addf %10, %17 : vector<64x32xf32>
    %c0_14 = arith.constant 0 : index
    %c1_15 = arith.constant 1 : index
    %c0_16 = arith.constant 0 : index
    %c0_17 = arith.constant 0 : index
    %19 = vector.load %arg1[%c0_14, %c1_15, %c0_16, %c0_17] : memref<4x9x9x4xf32, #tpu.memory_space<vmem>>, vector<1x8x8x4xf32>
    %20 = vector.shape_cast %19 : vector<1x8x8x4xf32> to vector<8x8x4xf32>
    %21 = vector.shape_cast %20 : vector<8x8x4xf32> to vector<64x4xf32>
    %22 = arith.truncf %21 : vector<64x4xf32> to vector<64x4xbf16>
    %c8 = arith.constant 8 : index
    %c0_18 = arith.constant 0 : index
    %c0_19 = arith.constant 0 : index
    %23 = vector.load %arg2[%c8, %c0_18, %c0_19] : memref<16x4x32xbf16, #tpu.memory_space<vmem>>, vector<1x4x32xbf16>
    %24 = vector.shape_cast %23 : vector<1x4x32xbf16> to vector<4x32xbf16>
    %cst_20 = arith.constant dense<0.000000e+00> : vector<64x32xf32>
    %25 = tpu.matmul %22, %24, %cst_20 {dimension_numbers = #tpu.dot_dimension_numbers<[1], [0], [0], [1], [0, 0, 1, 1], [], []>} : vector<64x4xbf16>, vector<4x32xbf16>, vector<64x32xf32> -> vector<64x32xf32>
    %26 = arith.addf %18, %25 : vector<64x32xf32>
    %c0_21 = arith.constant 0 : index
    %c1_22 = arith.constant 1 : index
    %c1_23 = arith.constant 1 : index
    %c0_24 = arith.constant 0 : index
    %27 = vector.load %arg1[%c0_21, %c1_22, %c1_23, %c0_24] : memref<4x9x9x4xf32, #tpu.memory_space<vmem>>, vector<1x8x8x4xf32>
    %28 = vector.shape_cast %27 : vector<1x8x8x4xf32> to vector<8x8x4xf32>
    %29 = vector.shape_cast %28 : vector<8x8x4xf32> to vector<64x4xf32>
    %30 = arith.truncf %29 : vector<64x4xf32> to vector<64x4xbf16>
    %c10 = arith.constant 10 : index
    %c0_25 = arith.constant 0 : index
    %c0_26 = arith.constant 0 : index
    %31 = vector.load %arg2[%c10, %c0_25, %c0_26] : memref<16x4x32xbf16, #tpu.memory_space<vmem>>, vector<1x4x32xbf16>
    %32 = vector.shape_cast %31 : vector<1x4x32xbf16> to vector<4x32xbf16>
    %cst_27 = arith.constant dense<0.000000e+00> : vector<64x32xf32>
    %33 = tpu.matmul %30, %32, %cst_27 {dimension_numbers = #tpu.dot_dimension_numbers<[1], [0], [0], [1], [0, 0, 1, 1], [], []>} : vector<64x4xbf16>, vector<4x32xbf16>, vector<64x32xf32> -> vector<64x32xf32>
    %34 = arith.addf %26, %33 : vector<64x32xf32>
    %c1_28 = arith.constant 1 : index
    %c0_29 = arith.constant 0 : index
    %c0_30 = arith.constant 0 : index
    %c0_31 = arith.constant 0 : index
    %35 = vector.load %arg1[%c1_28, %c0_29, %c0_30, %c0_31] : memref<4x9x9x4xf32, #tpu.memory_space<vmem>>, vector<1x8x8x4xf32>
    %36 = vector.shape_cast %35 : vector<1x8x8x4xf32> to vector<8x8x4xf32>
    %37 = vector.shape_cast %36 : vector<8x8x4xf32> to vector<64x4xf32>
    %38 = arith.truncf %37 : vector<64x4xf32> to vector<64x4xbf16>
    %c1_32 = arith.constant 1 : index
    %c0_33 = arith.constant 0 : index
    %c0_34 = arith.constant 0 : index
    %39 = vector.load %arg2[%c1_32, %c0_33, %c0_34] : memref<16x4x32xbf16, #tpu.memory_space<vmem>>, vector<1x4x32xbf16>
    %40 = vector.shape_cast %39 : vector<1x4x32xbf16> to vector<4x32xbf16>
    %cst_35 = arith.constant dense<0.000000e+00> : vector<64x32xf32>
    %41 = tpu.matmul %38, %40, %cst_35 {dimension_numbers = #tpu.dot_dimension_numbers<[1], [0], [0], [1], [0, 0, 1, 1], [], []>} : vector<64x4xbf16>, vector<4x32xbf16>, vector<64x32xf32> -> vector<64x32xf32>
    %42 = arith.addf %34, %41 : vector<64x32xf32>
    %c1_36 = arith.constant 1 : index
    %c0_37 = arith.constant 0 : index
    %c1_38 = arith.constant 1 : index
    %c0_39 = arith.constant 0 : index
    %43 = vector.load %arg1[%c1_36, %c0_37, %c1_38, %c0_39] : memref<4x9x9x4xf32, #tpu.memory_space<vmem>>, vector<1x8x8x4xf32>
    %44 = vector.shape_cast %43 : vector<1x8x8x4xf32> to vector<8x8x4xf32>
    %45 = vector.shape_cast %44 : vector<8x8x4xf32> to vector<64x4xf32>
    %46 = arith.truncf %45 : vector<64x4xf32> to vector<64x4xbf16>
    %c3 = arith.constant 3 : index
    %c0_40 = arith.constant 0 : index
    %c0_41 = arith.constant 0 : index
    %47 = vector.load %arg2[%c3, %c0_40, %c0_41] : memref<16x4x32xbf16, #tpu.memory_space<vmem>>, vector<1x4x32xbf16>
    %48 = vector.shape_cast %47 : vector<1x4x32xbf16> to vector<4x32xbf16>
    %cst_42 = arith.constant dense<0.000000e+00> : vector<64x32xf32>
    %49 = tpu.matmul %46, %48, %cst_42 {dimension_numbers = #tpu.dot_dimension_numbers<[1], [0], [0], [1], [0, 0, 1, 1], [], []>} : vector<64x4xbf16>, vector<4x32xbf16>, vector<64x32xf32> -> vector<64x32xf32>
    %50 = arith.addf %42, %49 : vector<64x32xf32>
    %c1_43 = arith.constant 1 : index
    %c1_44 = arith.constant 1 : index
    %c0_45 = arith.constant 0 : index
    %c0_46 = arith.constant 0 : index
    %51 = vector.load %arg1[%c1_43, %c1_44, %c0_45, %c0_46] : memref<4x9x9x4xf32, #tpu.memory_space<vmem>>, vector<1x8x8x4xf32>
    %52 = vector.shape_cast %51 : vector<1x8x8x4xf32> to vector<8x8x4xf32>
    %53 = vector.shape_cast %52 : vector<8x8x4xf32> to vector<64x4xf32>
    %54 = arith.truncf %53 : vector<64x4xf32> to vector<64x4xbf16>
    %c9 = arith.constant 9 : index
    %c0_47 = arith.constant 0 : index
    %c0_48 = arith.constant 0 : index
    %55 = vector.load %arg2[%c9, %c0_47, %c0_48] : memref<16x4x32xbf16, #tpu.memory_space<vmem>>, vector<1x4x32xbf16>
    %56 = vector.shape_cast %55 : vector<1x4x32xbf16> to vector<4x32xbf16>
    %cst_49 = arith.constant dense<0.000000e+00> : vector<64x32xf32>
    %57 = tpu.matmul %54, %56, %cst_49 {dimension_numbers = #tpu.dot_dimension_numbers<[1], [0], [0], [1], [0, 0, 1, 1], [], []>} : vector<64x4xbf16>, vector<4x32xbf16>, vector<64x32xf32> -> vector<64x32xf32>
    %58 = arith.addf %50, %57 : vector<64x32xf32>
    %c1_50 = arith.constant 1 : index
    %c1_51 = arith.constant 1 : index
    %c1_52 = arith.constant 1 : index
    %c0_53 = arith.constant 0 : index
    %59 = vector.load %arg1[%c1_50, %c1_51, %c1_52, %c0_53] : memref<4x9x9x4xf32, #tpu.memory_space<vmem>>, vector<1x8x8x4xf32>
    %60 = vector.shape_cast %59 : vector<1x8x8x4xf32> to vector<8x8x4xf32>
    %61 = vector.shape_cast %60 : vector<8x8x4xf32> to vector<64x4xf32>
    %62 = arith.truncf %61 : vector<64x4xf32> to vector<64x4xbf16>
    %c11 = arith.constant 11 : index
    %c0_54 = arith.constant 0 : index
    %c0_55 = arith.constant 0 : index
    %63 = vector.load %arg2[%c11, %c0_54, %c0_55] : memref<16x4x32xbf16, #tpu.memory_space<vmem>>, vector<1x4x32xbf16>
    %64 = vector.shape_cast %63 : vector<1x4x32xbf16> to vector<4x32xbf16>
    %cst_56 = arith.constant dense<0.000000e+00> : vector<64x32xf32>
    %65 = tpu.matmul %62, %64, %cst_56 {dimension_numbers = #tpu.dot_dimension_numbers<[1], [0], [0], [1], [0, 0, 1, 1], [], []>} : vector<64x4xbf16>, vector<4x32xbf16>, vector<64x32xf32> -> vector<64x32xf32>
    %66 = arith.addf %58, %65 : vector<64x32xf32>
    %c2_57 = arith.constant 2 : index
    %c0_58 = arith.constant 0 : index
    %c0_59 = arith.constant 0 : index
    %c0_60 = arith.constant 0 : index
    %67 = vector.load %arg1[%c2_57, %c0_58, %c0_59, %c0_60] : memref<4x9x9x4xf32, #tpu.memory_space<vmem>>, vector<1x8x8x4xf32>
    %68 = vector.shape_cast %67 : vector<1x8x8x4xf32> to vector<8x8x4xf32>
    %69 = vector.shape_cast %68 : vector<8x8x4xf32> to vector<64x4xf32>
    %70 = arith.truncf %69 : vector<64x4xf32> to vector<64x4xbf16>
    %c4 = arith.constant 4 : index
    %c0_61 = arith.constant 0 : index
    %c0_62 = arith.constant 0 : index
    %71 = vector.load %arg2[%c4, %c0_61, %c0_62] : memref<16x4x32xbf16, #tpu.memory_space<vmem>>, vector<1x4x32xbf16>
    %72 = vector.shape_cast %71 : vector<1x4x32xbf16> to vector<4x32xbf16>
    %cst_63 = arith.constant dense<0.000000e+00> : vector<64x32xf32>
    %73 = tpu.matmul %70, %72, %cst_63 {dimension_numbers = #tpu.dot_dimension_numbers<[1], [0], [0], [1], [0, 0, 1, 1], [], []>} : vector<64x4xbf16>, vector<4x32xbf16>, vector<64x32xf32> -> vector<64x32xf32>
    %74 = arith.addf %66, %73 : vector<64x32xf32>
    %c2_64 = arith.constant 2 : index
    %c0_65 = arith.constant 0 : index
    %c1_66 = arith.constant 1 : index
    %c0_67 = arith.constant 0 : index
    %75 = vector.load %arg1[%c2_64, %c0_65, %c1_66, %c0_67] : memref<4x9x9x4xf32, #tpu.memory_space<vmem>>, vector<1x8x8x4xf32>
    %76 = vector.shape_cast %75 : vector<1x8x8x4xf32> to vector<8x8x4xf32>
    %77 = vector.shape_cast %76 : vector<8x8x4xf32> to vector<64x4xf32>
    %78 = arith.truncf %77 : vector<64x4xf32> to vector<64x4xbf16>
    %c6 = arith.constant 6 : index
    %c0_68 = arith.constant 0 : index
    %c0_69 = arith.constant 0 : index
    %79 = vector.load %arg2[%c6, %c0_68, %c0_69] : memref<16x4x32xbf16, #tpu.memory_space<vmem>>, vector<1x4x32xbf16>
    %80 = vector.shape_cast %79 : vector<1x4x32xbf16> to vector<4x32xbf16>
    %cst_70 = arith.constant dense<0.000000e+00> : vector<64x32xf32>
    %81 = tpu.matmul %78, %80, %cst_70 {dimension_numbers = #tpu.dot_dimension_numbers<[1], [0], [0], [1], [0, 0, 1, 1], [], []>} : vector<64x4xbf16>, vector<4x32xbf16>, vector<64x32xf32> -> vector<64x32xf32>
    %82 = arith.addf %74, %81 : vector<64x32xf32>
    %c2_71 = arith.constant 2 : index
    %c1_72 = arith.constant 1 : index
    %c0_73 = arith.constant 0 : index
    %c0_74 = arith.constant 0 : index
    %83 = vector.load %arg1[%c2_71, %c1_72, %c0_73, %c0_74] : memref<4x9x9x4xf32, #tpu.memory_space<vmem>>, vector<1x8x8x4xf32>
    %84 = vector.shape_cast %83 : vector<1x8x8x4xf32> to vector<8x8x4xf32>
    %85 = vector.shape_cast %84 : vector<8x8x4xf32> to vector<64x4xf32>
    %86 = arith.truncf %85 : vector<64x4xf32> to vector<64x4xbf16>
    %c12 = arith.constant 12 : index
    %c0_75 = arith.constant 0 : index
    %c0_76 = arith.constant 0 : index
    %87 = vector.load %arg2[%c12, %c0_75, %c0_76] : memref<16x4x32xbf16, #tpu.memory_space<vmem>>, vector<1x4x32xbf16>
    %88 = vector.shape_cast %87 : vector<1x4x32xbf16> to vector<4x32xbf16>
    %cst_77 = arith.constant dense<0.000000e+00> : vector<64x32xf32>
    %89 = tpu.matmul %86, %88, %cst_77 {dimension_numbers = #tpu.dot_dimension_numbers<[1], [0], [0], [1], [0, 0, 1, 1], [], []>} : vector<64x4xbf16>, vector<4x32xbf16>, vector<64x32xf32> -> vector<64x32xf32>
    %90 = arith.addf %82, %89 : vector<64x32xf32>
    %c2_78 = arith.constant 2 : index
    %c1_79 = arith.constant 1 : index
    %c1_80 = arith.constant 1 : index
    %c0_81 = arith.constant 0 : index
    %91 = vector.load %arg1[%c2_78, %c1_79, %c1_80, %c0_81] : memref<4x9x9x4xf32, #tpu.memory_space<vmem>>, vector<1x8x8x4xf32>
    %92 = vector.shape_cast %91 : vector<1x8x8x4xf32> to vector<8x8x4xf32>
    %93 = vector.shape_cast %92 : vector<8x8x4xf32> to vector<64x4xf32>
    %94 = arith.truncf %93 : vector<64x4xf32> to vector<64x4xbf16>
    %c14 = arith.constant 14 : index
    %c0_82 = arith.constant 0 : index
    %c0_83 = arith.constant 0 : index
    %95 = vector.load %arg2[%c14, %c0_82, %c0_83] : memref<16x4x32xbf16, #tpu.memory_space<vmem>>, vector<1x4x32xbf16>
    %96 = vector.shape_cast %95 : vector<1x4x32xbf16> to vector<4x32xbf16>
    %cst_84 = arith.constant dense<0.000000e+00> : vector<64x32xf32>
    %97 = tpu.matmul %94, %96, %cst_84 {dimension_numbers = #tpu.dot_dimension_numbers<[1], [0], [0], [1], [0, 0, 1, 1], [], []>} : vector<64x4xbf16>, vector<4x32xbf16>, vector<64x32xf32> -> vector<64x32xf32>
    %98 = arith.addf %90, %97 : vector<64x32xf32>
    %c3_85 = arith.constant 3 : index
    %c0_86 = arith.constant 0 : index
    %c0_87 = arith.constant 0 : index
    %c0_88 = arith.constant 0 : index
    %99 = vector.load %arg1[%c3_85, %c0_86, %c0_87, %c0_88] : memref<4x9x9x4xf32, #tpu.memory_space<vmem>>, vector<1x8x8x4xf32>
    %100 = vector.shape_cast %99 : vector<1x8x8x4xf32> to vector<8x8x4xf32>
    %101 = vector.shape_cast %100 : vector<8x8x4xf32> to vector<64x4xf32>
    %102 = arith.truncf %101 : vector<64x4xf32> to vector<64x4xbf16>
    %c5 = arith.constant 5 : index
    %c0_89 = arith.constant 0 : index
    %c0_90 = arith.constant 0 : index
    %103 = vector.load %arg2[%c5, %c0_89, %c0_90] : memref<16x4x32xbf16, #tpu.memory_space<vmem>>, vector<1x4x32xbf16>
    %104 = vector.shape_cast %103 : vector<1x4x32xbf16> to vector<4x32xbf16>
    %cst_91 = arith.constant dense<0.000000e+00> : vector<64x32xf32>
    %105 = tpu.matmul %102, %104, %cst_91 {dimension_numbers = #tpu.dot_dimension_numbers<[1], [0], [0], [1], [0, 0, 1, 1], [], []>} : vector<64x4xbf16>, vector<4x32xbf16>, vector<64x32xf32> -> vector<64x32xf32>
    %106 = arith.addf %98, %105 : vector<64x32xf32>
    %c3_92 = arith.constant 3 : index
    %c0_93 = arith.constant 0 : index
    %c1_94 = arith.constant 1 : index
    %c0_95 = arith.constant 0 : index
    %107 = vector.load %arg1[%c3_92, %c0_93, %c1_94, %c0_95] : memref<4x9x9x4xf32, #tpu.memory_space<vmem>>, vector<1x8x8x4xf32>
    %108 = vector.shape_cast %107 : vector<1x8x8x4xf32> to vector<8x8x4xf32>
    %109 = vector.shape_cast %108 : vector<8x8x4xf32> to vector<64x4xf32>
    %110 = arith.truncf %109 : vector<64x4xf32> to vector<64x4xbf16>
    %c7 = arith.constant 7 : index
    %c0_96 = arith.constant 0 : index
    %c0_97 = arith.constant 0 : index
    %111 = vector.load %arg2[%c7, %c0_96, %c0_97] : memref<16x4x32xbf16, #tpu.memory_space<vmem>>, vector<1x4x32xbf16>
    %112 = vector.shape_cast %111 : vector<1x4x32xbf16> to vector<4x32xbf16>
    %cst_98 = arith.constant dense<0.000000e+00> : vector<64x32xf32>
    %113 = tpu.matmul %110, %112, %cst_98 {dimension_numbers = #tpu.dot_dimension_numbers<[1], [0], [0], [1], [0, 0, 1, 1], [], []>} : vector<64x4xbf16>, vector<4x32xbf16>, vector<64x32xf32> -> vector<64x32xf32>
    %114 = arith.addf %106, %113 : vector<64x32xf32>
    %c3_99 = arith.constant 3 : index
    %c1_100 = arith.constant 1 : index
    %c0_101 = arith.constant 0 : index
    %c0_102 = arith.constant 0 : index
    %115 = vector.load %arg1[%c3_99, %c1_100, %c0_101, %c0_102] : memref<4x9x9x4xf32, #tpu.memory_space<vmem>>, vector<1x8x8x4xf32>
    %116 = vector.shape_cast %115 : vector<1x8x8x4xf32> to vector<8x8x4xf32>
    %117 = vector.shape_cast %116 : vector<8x8x4xf32> to vector<64x4xf32>
    %118 = arith.truncf %117 : vector<64x4xf32> to vector<64x4xbf16>
    %c13 = arith.constant 13 : index
    %c0_103 = arith.constant 0 : index
    %c0_104 = arith.constant 0 : index
    %119 = vector.load %arg2[%c13, %c0_103, %c0_104] : memref<16x4x32xbf16, #tpu.memory_space<vmem>>, vector<1x4x32xbf16>
    %120 = vector.shape_cast %119 : vector<1x4x32xbf16> to vector<4x32xbf16>
    %cst_105 = arith.constant dense<0.000000e+00> : vector<64x32xf32>
    %121 = tpu.matmul %118, %120, %cst_105 {dimension_numbers = #tpu.dot_dimension_numbers<[1], [0], [0], [1], [0, 0, 1, 1], [], []>} : vector<64x4xbf16>, vector<4x32xbf16>, vector<64x32xf32> -> vector<64x32xf32>
    %122 = arith.addf %114, %121 : vector<64x32xf32>
    %c3_106 = arith.constant 3 : index
    %c1_107 = arith.constant 1 : index
    %c1_108 = arith.constant 1 : index
    %c0_109 = arith.constant 0 : index
    %123 = vector.load %arg1[%c3_106, %c1_107, %c1_108, %c0_109] : memref<4x9x9x4xf32, #tpu.memory_space<vmem>>, vector<1x8x8x4xf32>
    %124 = vector.shape_cast %123 : vector<1x8x8x4xf32> to vector<8x8x4xf32>
    %125 = vector.shape_cast %124 : vector<8x8x4xf32> to vector<64x4xf32>
    %126 = arith.truncf %125 : vector<64x4xf32> to vector<64x4xbf16>
    %c15 = arith.constant 15 : index
    %c0_110 = arith.constant 0 : index
    %c0_111 = arith.constant 0 : index
    %127 = vector.load %arg2[%c15, %c0_110, %c0_111] : memref<16x4x32xbf16, #tpu.memory_space<vmem>>, vector<1x4x32xbf16>
    %128 = vector.shape_cast %127 : vector<1x4x32xbf16> to vector<4x32xbf16>
    %cst_112 = arith.constant dense<0.000000e+00> : vector<64x32xf32>
    %129 = tpu.matmul %126, %128, %cst_112 {dimension_numbers = #tpu.dot_dimension_numbers<[1], [0], [0], [1], [0, 0, 1, 1], [], []>} : vector<64x4xbf16>, vector<4x32xbf16>, vector<64x32xf32> -> vector<64x32xf32>
    %130 = arith.addf %122, %129 : vector<64x32xf32>
    %c0_113 = arith.constant 0 : index
    %c0_114 = arith.constant 0 : index
    %131 = vector.load %arg4[%c0_113, %c0_114] : memref<64x32xf32, #tpu.memory_space<vmem>>, vector<64x32xf32>
    tpu.vector_store %arg4[%c0_113, %c0_114], %130 {strides = array<i32>} : memref<64x32xf32, #tpu.memory_space<vmem>>, vector<64x32xf32>,
    return
  }
  func.func @transform_0(%arg0: i32) -> (i32, i32, i32, i32) {
    %c0_i32 = arith.constant 0 : i32
    %c0_i32_0 = arith.constant 0 : i32
    %c0_i32_1 = arith.constant 0 : i32
    %c0_i32_2 = arith.constant 0 : i32
    return %arg0, %c0_i32, %c0_i32_0, %c0_i32_1 : i32, i32, i32, i32
  }
  func.func @transform_1(%arg0: i32) -> (i32, i32, i32) {
    %c0_i32 = arith.constant 0 : i32
    %c0_i32_0 = arith.constant 0 : i32
    %c0_i32_1 = arith.constant 0 : i32
    %c0_i32_2 = arith.constant 0 : i32
    return %c0_i32, %c0_i32_0, %c0_i32_1 : i32, i32, i32
  }
  func.func @transform_2(%arg0: i32) -> (i32, i32) {
    %c0_i32 = arith.constant 0 : i32
    %c0_i32_0 = arith.constant 0 : i32
    %c0_i32_1 = arith.constant 0 : i32
    return %c0_i32, %c0_i32_0 : i32, i32
  }
  func.func @transform_3(%arg0: i32) -> (i32, i32) {
    %c0_i32 = arith.constant 0 : i32
    %c0_i32_0 = arith.constant 0 : i32
    return %arg0, %c0_i32 : i32, i32
  }
}

</mosaic_0001>

<llo_original>
// kernel: downsample_sr.1
$region0: #{downsample_sr.1}
  #allocation0 [shape = 'u32[]', space=smem, size = 0x4, offset = 0x4, fixed_abs, tag = 'smem constant byte address 0x4 - core index']
  #allocation1 [shape = 'u32[144,128]{1,0:T(1,128)}', space=vmem, size = 0x12000, scoped, tag = 'internal scratch']
  %s0 = inlined_call_operand.vmem [shape: f32[8,9,9,4], index: 0, kind: input, shape index: {}]
  %s1 = inlined_call_operand.vmem [shape: bf16[16,4,32], index: 1, kind: input, shape index: {}]
  %s2 = inlined_call_operand.vmem [shape: f32[1,32], index: 2, kind: input, shape index: {}]
  %s3 = inlined_call_operand.hbm [shape: f32[128,32], index: 3, kind: output, shape index: {}]
  %s4 = sld [smem:[#allocation0]]
  $region45: #{downsample_sr.1} parent=0
    _
  %s6 = ssub.s32 1, %s4
  %s7 = scalar_select 0, %s6, %s4
  $region1: #{downsample_sr.1} parent=0
    #allocation2 [shape = 'u8[65536]{0}', space=vmem, size = 0x10000, scoped, tag = 'output window, operand 0']
    #allocation3 [shape = 's32[2]{0}', space=sflag, size = 0x8, scoped, tag = 'scoped memory for downsample_sr.1']
    %8 = vsyncpa [#allocation3], 0
    %s9 = scalar_lea.sflag [#allocation3], 1
    %10 = vsyncpa %s9, 0
    loop: start=0, step=1, limit=4
    $region2: #{downsample_sr.1} parent=1 // loop_pre_header
      _
    $region3: #{downsample_sr.1} parent=1 // loop_header
      %s12 = sphi 0, %s16
      %p13 = scmp.ge.s32.totalorder %s12, 4
      %s22 = sphi 0, %s24
      %s25 = sphi 0, %s22
      %s26 = sphi 0, %s25
      %s42 = sphi 0, %s26
      %s46 = sphi 0, %s46
      %s48 = sphi 0, %s46
      %s49 = sphi 0, %s48
      %s63 = sphi 0, %s49
      %s67 = sphi 0, %s67
      %s69 = sphi 0, %s67
      %s70 = sphi 0, %s69
      %s84 = sphi 0, %s70
      %s90 = sphi 0, %s92
      %s93 = sphi 0, %s90
      %s94 = sphi 0, %s93
      %s110 = sphi 0, %s94
    $region4: #{downsample_sr.1} parent=1 // loop_header_branch
      %15 = sbr.rel (%p13) target = $region8
    $region5: #{downsample_sr.1} parent=1 // loop_body
      %s17 = ssub.s32 %s12, 1
      %s18 = ssub.s32 %s12, 2
      %s19 = sadd.s32 %s12, 1
      %s20 = ssub.s32 %s12, %s19
      %p21 = scmp.eq.s32.totalorder %s20, 0
      %s23 = sadd.s32 %s22, 1
      %s24 = scalar_select %p21, %s22, %s23
      %p27 = pneg %p21
      %p28 = scmp.eq.s32.totalorder %s12, 1
      %p29 = por %p27, %p28
      %p30 = scmp.ne.s32.totalorder %s22, %s25
      %p31 = scmp.eq.s32.totalorder %s12, 0
      %p32 = por %p30, %p31
      %p33 = scmp.ne.s32.totalorder %s22, %s25
      %p34 = scmp.eq.s32.totalorder %s17, 1
      %p35 = por %p33, %p34
      %p36 = scmp.ne.s32.totalorder %s25, %s26
      %p37 = scmp.eq.s32.totalorder %s17, 0
      %p38 = por %p36, %p37
      %p39 = scmp.ne.s32.totalorder %s25, %s26
      %p40 = scmp.eq.s32.totalorder %s18, 1
      %p41 = por %p39, %p40
      %p43 = scmp.ne.s32.totalorder %s26, %s42
      %p44 = scmp.eq.s32.totalorder %s18, 0
      %p45 = por %p43, %p44
      %s47 = sadd.s32 %s46, 1
      %p50 = scmp.eq.s32.totalorder %s12, 1
      %p51 = scmp.ne.s32.totalorder %s46, %s48
      %p52 = scmp.eq.s32.totalorder %s12, 0
      %p53 = por %p51, %p52
      %p54 = scmp.ne.s32.totalorder %s46, %s48
      %p55 = scmp.eq.s32.totalorder %s17, 1
      %p56 = por %p54, %p55
      %p57 = scmp.ne.s32.totalorder %s48, %s49
      %p58 = scmp.eq.s32.totalorder %s17, 0
      %p59 = por %p57, %p58
      %p60 = scmp.ne.s32.totalorder %s48, %s49
      %p61 = scmp.eq.s32.totalorder %s18, 1
      %p62 = por %p60, %p61
      %p64 = scmp.ne.s32.totalorder %s49, %s63
      %p65 = scmp.eq.s32.totalorder %s18, 0
      %p66 = por %p64, %p65
      %s68 = sadd.s32 %s67, 1
      %p71 = scmp.eq.s32.totalorder %s12, 1
      %p72 = scmp.ne.s32.totalorder %s67, %s69
      %p73 = scmp.eq.s32.totalorder %s12, 0
      %p74 = por %p72, %p73
      %p75 = scmp.ne.s32.totalorder %s67, %s69
      %p76 = scmp.eq.s32.totalorder %s17, 1
      %p77 = por %p75, %p76
      %p78 = scmp.ne.s32.totalorder %s69, %s70
      %p79 = scmp.eq.s32.totalorder %s17, 0
      %p80 = por %p78, %p79
      %p81 = scmp.ne.s32.totalorder %s69, %s70
      %p82 = scmp.eq.s32.totalorder %s18, 1
      %p83 = por %p81, %p82
      %p85 = scmp.ne.s32.totalorder %s70, %s84
      %p86 = scmp.eq.s32.totalorder %s18, 0
      %p87 = por %p85, %p86
      %s88 = ssub.s32 %s12, %s19
      %p89 = scmp.eq.s32.totalorder %s88, 0
      %s91 = sadd.s32 %s90, 1
      %s92 = scalar_select %p89, %s90, %s91
      %p95 = pneg %p89
      %p96 = scmp.eq.s32.totalorder %s12, 1
      %p97 = por %p95, %p96
      %p98 = scmp.ne.s32.totalorder %s90, %s93
      %p99 = scmp.eq.s32.totalorder %s12, 0
      %p100 = por %p98, %p99
      %p101 = scmp.ne.s32.totalorder %s90, %s93
      %p102 = scmp.eq.s32.totalorder %s17, 1
      %p103 = por %p101, %p102
      %p104 = scmp.ne.s32.totalorder %s93, %s94
      %p105 = scmp.eq.s32.totalorder %s17, 0
      %p106 = por %p104, %p105
      %p107 = scmp.ne.s32.totalorder %s93, %s94
      %p108 = scmp.eq.s32.totalorder %s18, 1
      %p109 = por %p107, %p108
      %p111 = scmp.ne.s32.totalorder %s94, %s110
      %p112 = scmp.eq.s32.totalorder %s18, 0
      %p113 = por %p111, %p112
      %p114 = scmp.le.s32.totalorder 1, %s12
      %p115 = scmp.lt.s32.totalorder %s12, 3
      %p116 = pnand %p114, %p115
      %p117 = pneg %p116
      // Predicated region
      $region9: #{downsample_sr.1} parent=5 // pred_check
        _
      $region10: #{downsample_sr.1} parent=5 // pred_check_branch
        %119 = sbr.rel (%p116) target = $region12
      $region11: #{downsample_sr.1} parent=5 // pred_region
        %s120 = ssub.s32 %s12, 1
        // Predicated region
        $region13: #{downsample_sr.1} parent=11 // pred_check
          %p121 = pneg %p59
        $region14: #{downsample_sr.1} parent=11 // pred_check_branch
          %123 = sbr.rel (%p121) target = $region16
        $region15: #{downsample_sr.1} parent=11 // pred_region
          _
        $region16: #{downsample_sr.1} parent=11 // pred_fallthru
          _
        // Predicated region
        $region17: #{downsample_sr.1} parent=11 // pred_check
          %p124 = pneg %p80
        $region18: #{downsample_sr.1} parent=11 // pred_check_branch
          %126 = sbr.rel (%p124) target = $region20
        $region19: #{downsample_sr.1} parent=11 // pred_region
          _
        $region20: #{downsample_sr.1} parent=11 // pred_fallthru
          _
      $region12: #{downsample_sr.1} parent=5 // pred_fallthru
        _
      %p127 = scmp.lt.s32.totalorder %s12, 2
      // Predicated region
      $region21: #{downsample_sr.1} parent=5 // pred_check
        %p128 = pneg %p127
      $region22: #{downsample_sr.1} parent=5 // pred_check_branch
        %130 = sbr.rel (%p128) target = $region24
      $region23: #{downsample_sr.1} parent=5 // pred_region
        // Predicated region
        $region25: #{downsample_sr.1} parent=23 // pred_check
          %p131 = pneg %p32
        $region26: #{downsample_sr.1} parent=23 // pred_check_branch
          %133 = sbr.rel (%p131) target = $region28
        $region27: #{downsample_sr.1} parent=23 // pred_region
          %s134 = smul.u32 4, %s12
          %p135 = scmp.lt.s32.totalorder %s134, 7
          %s136 = scalar_select %p135, %s134, 7
          %s137 = smul.addr %s136, 18
          %s138 = smul.addr %s137, 8
          %s139 = scalar_lea.vmem %s0, %s138
          %s140 = smul.u32 4, %s12
        $region28: #{downsample_sr.1} parent=23 // pred_fallthru
          _
      $region24: #{downsample_sr.1} parent=5 // pred_fallthru
        _
      %p141 = scmp.le.s32.totalorder 1, %s12
      %p142 = scmp.lt.s32.totalorder %s12, 3
      %p143 = pnand %p141, %p142
      %p144 = pneg %p143
      // Predicated region
      $region29: #{downsample_sr.1} parent=5 // pred_check
        _
      $region30: #{downsample_sr.1} parent=5 // pred_check_branch
        %146 = sbr.rel (%p143) target = $region32
      $region31: #{downsample_sr.1} parent=5 // pred_region
        %s147 = ssub.s32 %s12, 1
        %s148 = smul.u32 4, %s17
        %p149 = scmp.lt.s32.totalorder %s148, 7
        %s150 = scalar_select %p149, %s148, 7
        %s151 = smul.addr %s150, 18
        %s152 = smul.addr %s151, 8
        %s153 = scalar_lea.vmem %s0, %s152
        %p154 = pneg %p38
        %p155 = pneg %p35
        %p156 = pneg %p59
        %p157 = pneg %p56
        %p158 = pneg %p80
        %p159 = pneg %p77
        %p160 = pneg %p106
        %p161 = pneg %p103
        %s162 = sand.u32 %s93, 1
        %s163 = scalar_lea.sflag [#allocation3], %s162
        %s164 = sand.u32 %s93, 1
        %s165 = smul.addr %s164, 64
        %s166 = scalar_lea.vmem [#allocation2], %s165
        %s167 = smul.u32 4, %s17
        %p168 = scmp.lt.s32.totalorder %s167, 7
        %s169 = scalar_select %p168, %s167, 7
        %s170 = smul.addr %s169, 18
        %s171 = smul.addr %s170, 8
        %s172 = scalar_lea.vmem %s0, %s171
        %s173 = smul.u32 4, %s17
        %s174 = smul.u32 8, %s17
        %v176 = vld [vmem:[%s2] sm:$0x1]
        %v178 = vlaneseq
        %v179 = vshrl.u32 %v178, 7
        %v180 = vsub.s32 0, %v179
        %v181 = vrot.slane %v176, %v180
        %v183 = vld [vmem:[%s172] sm:$0xff]
        %v184 = vld [vmem:[%s172 + $0x10] sm:$0xff]
        %v185 = vld [vmem:[%s172 + $0x20] sm:$0xff]
        %v186 = vld [vmem:[%s172 + $0x30] sm:$0xff]
        %v187 = vld [vmem:[%s172 + $0x40] sm:$0xff]
        %v188 = vld [vmem:[%s172 + $0x50] sm:$0xff]
        %v189 = vld [vmem:[%s172 + $0x60] sm:$0xff]
        %v190 = vld [vmem:[%s172 + $0x70] sm:$0xff]
        %v191 = vpack.c.bf16 %v184, %v183
        %v192 = vpack.c.bf16 %v186, %v185
        %v193 = vpack.c.bf16 %v188, %v187
        %v194 = vpack.c.bf16 %v190, %v189
        %v195 = vld [vmem:[%s1] sm:$0x3]
        %vm196 = vcmask 31744
        %v198 = vsel %vm196, %v191, 0
        %v201 = vsel %vm196, %v192, 0
        %v204 = vsel %vm196, %v193, 0
        %v207 = vsel %vm196, %v194, 0
        %vm209 = vcmask 1041408
        %v211 = vsel %vm209, %v195, 0
        %213 = vmatprep.subr.bf16.mxu0 0
        %214 = vmatpush1.bf16.msra.mxu0 %v211
        %215 = vmatprep.subr.bf16.mxu0 0
        %216 = vmatpush1.bf16.msra.mxu0 0
        %217 = vmatprep.subr.bf16.mxu0 0
        %218 = vmatpush1.bf16.msra.mxu0 0
        %219 = vmatprep.subr.bf16.mxu0 0
        %220 = vmatpush1.bf16.msra.mxu0 0
        %221 = vmatprep.subr.bf16.mxu0 0
        %222 = vmatpush1.bf16.msra.mxu0 0
        %223 = vmatprep.subr.bf16.mxu0 0
        %224 = vmatpush1.bf16.msra.mxu0 0
        %225 = vmatprep.subr.bf16.mxu0 0
        %226 = vmatpush1.bf16.msra.mxu0 0
        %227 = vmatprep.subr.bf16.mxu0 0
        %228 = vmatpush1.bf16.msra.mxu0 0
        %229 = vmatprep.subr.bf16.mxu0 0
        %230 = vmatpush1.bf16.msra.mxu0 0
        %231 = vmatprep.subr.bf16.mxu0 0
        %232 = vmatpush1.bf16.msra.mxu0 0
        %233 = vmatprep.subr.bf16.mxu0 0
        %234 = vmatpush1.bf16.msra.mxu0 0
        %235 = vmatprep.subr.bf16.mxu0 0
        %236 = vmatpush1.bf16.msra.mxu0 0
        %237 = vmatprep.subr.bf16.mxu0 0
        %238 = vmatpush1.bf16.msra.mxu0 0
        %239 = vmatprep.subr.bf16.mxu0 0
        %240 = vmatpush1.bf16.msra.mxu0 0
        %241 = vmatprep.subr.bf16.mxu0 0
        %242 = vmatpush1.bf16.msra.mxu0 0
        %243 = vmatprep.subr.bf16.mxu0 0
        %244 = vmatpush1.bf16.msra.mxu0 0
        %245 = vmatprep.mubr.bf16.mxu0 0
        %246 = vmatmul.mubr.bf16.gmra.mrb[0].mxu0 %v198
        %v247 = vpop.f32.mrb[0].mxu0
        %v248 = vadd.f32 0.0, %v247
        %v249 = vpop.f32.mrb[0].mxu0
        %v250 = vpop.f32.mrb[0].mxu0
        %v251 = vadd.f32 0.0, %v250
        %v252 = vpop.f32.mrb[0].mxu0
        %253 = vmatprep.mubr.bf16.mxu0 0
        %254 = vmatmul.mubr.bf16.gmra.mrb[0].mxu0 %v201
        %v255 = vpop.f32.mrb[0].mxu0
        %v256 = vadd.f32 0.0, %v255
        %v257 = vpop.f32.mrb[0].mxu0
        %v258 = vpop.f32.mrb[0].mxu0
        %v259 = vadd.f32 0.0, %v258
        %v260 = vpop.f32.mrb[0].mxu0
        %261 = vmatprep.mubr.bf16.mxu0 0
        %262 = vmatmul.mubr.bf16.gmra.mrb[0].mxu0 %v204
        %v263 = vpop.f32.mrb[0].mxu0
        %v264 = vadd.f32 0.0, %v263
        %v265 = vpop.f32.mrb[0].mxu0
        %v266 = vpop.f32.mrb[0].mxu0
        %v267 = vadd.f32 0.0, %v266
        %v268 = vpop.f32.mrb[0].mxu0
        %269 = vmatprep.mubr.bf16.mxu0 0
        %270 = vmatmul.mubr.bf16.gmra.mrb[0].mxu0 %v207
        %v271 = vpop.f32.mrb[0].mxu0
        %v272 = vadd.f32 0.0, %v271
        %v273 = vpop.f32.mrb[0].mxu0
        %v274 = vpop.f32.mrb[0].mxu0
        %v275 = vadd.f32 0.0, %v274
        %v276 = vpop.f32.mrb[0].mxu0
        %277 = vdwg.mxu0
        %v278 = vadd.f32 %v181, %v248
        %v279 = vadd.f32 %v181, %v251
        %v280 = vadd.f32 %v181, %v256
        %v281 = vadd.f32 %v181, %v259
        %v282 = vadd.f32 %v181, %v264
        %v283 = vadd.f32 %v181, %v267
        %v284 = vadd.f32 %v181, %v272
        %v285 = vadd.f32 %v181, %v275
        %v286 = vld [vmem:[%s172 + $0x1] sm:$0xff]
        %v287 = vld [vmem:[%s172 + $0x11] sm:$0xff]
        %v288 = vld [vmem:[%s172 + $0x21] sm:$0xff]
        %v289 = vld [vmem:[%s172 + $0x31] sm:$0xff]
        %v290 = vld [vmem:[%s172 + $0x41] sm:$0xff]
        %v291 = vld [vmem:[%s172 + $0x51] sm:$0xff]
        %v292 = vld [vmem:[%s172 + $0x61] sm:$0xff]
        %v293 = vld [vmem:[%s172 + $0x71] sm:$0xff]
        %v294 = vpack.c.bf16 %v287, %v286
        %v295 = vpack.c.bf16 %v289, %v288
        %v296 = vpack.c.bf16 %v291, %v290
        %v297 = vpack.c.bf16 %v293, %v292
        %s298 = scalar_lea.vmem %s1, 4
        %v299 = vld [vmem:[%s298] sm:$0x3]
        %v301 = vsel %vm196, %v294, 0
        %v304 = vsel %vm196, %v295, 0
        %v307 = vsel %vm196, %v296, 0
        %v310 = vsel %vm196, %v297, 0
        %v313 = vsel %vm209, %v299, 0
        %315 = vmatprep.subr.bf16.mxu0 0
        %316 = vmatpush1.bf16.msra.mxu0 %v313
        %317 = vmatprep.subr.bf16.mxu0 0
        %318 = vmatpush1.bf16.msra.mxu0 0
        %319 = vmatprep.subr.bf16.mxu0 0
        %320 = vmatpush1.bf16.msra.mxu0 0
        %321 = vmatprep.subr.bf16.mxu0 0
        %322 = vmatpush1.bf16.msra.mxu0 0
        %323 = vmatprep.subr.bf16.mxu0 0
        %324 = vmatpush1.bf16.msra.mxu0 0
        %325 = vmatprep.subr.bf16.mxu0 0
        %326 = vmatpush1.bf16.msra.mxu0 0
        %327 = vmatprep.subr.bf16.mxu0 0
        %328 = vmatpush1.bf16.msra.mxu0 0
        %329 = vmatprep.subr.bf16.mxu0 0
        %330 = vmatpush1.bf16.msra.mxu0 0
        %331 = vmatprep.subr.bf16.mxu0 0
        %332 = vmatpush1.bf16.msra.mxu0 0
        %333 = vmatprep.subr.bf16.mxu0 0
        %334 = vmatpush1.bf16.msra.mxu0 0
        %335 = vmatprep.subr.bf16.mxu0 0
        %336 = vmatpush1.bf16.msra.mxu0 0
        %337 = vmatprep.subr.bf16.mxu0 0
        %338 = vmatpush1.bf16.msra.mxu0 0
        %339 = vmatprep.subr.bf16.mxu0 0
        %340 = vmatpush1.bf16.msra.mxu0 0
        %341 = vmatprep.subr.bf16.mxu0 0
        %342 = vmatpush1.bf16.msra.mxu0 0
        %343 = vmatprep.subr.bf16.mxu0 0
        %344 = vmatpush1.bf16.msra.mxu0 0
        %345 = vmatprep.subr.bf16.mxu0 0
        %346 = vmatpush1.bf16.msra.mxu0 0
        %347 = vmatprep.mubr.bf16.mxu0 0
        %348 = vmatmul.mubr.bf16.gmra.mrb[0].mxu0 %v301
        %v349 = vpop.f32.mrb[0].mxu0
        %v350 = vadd.f32 0.0, %v349
        %v351 = vpop.f32.mrb[0].mxu0
        %v352 = vpop.f32.mrb[0].mxu0
        %v353 = vadd.f32 0.0, %v352
        %v354 = vpop.f32.mrb[0].mxu0
        %355 = vmatprep.mubr.bf16.mxu0 0
        %356 = vmatmul.mubr.bf16.gmra.mrb[0].mxu0 %v304
        %v357 = vpop.f32.mrb[0].mxu0
        %v358 = vadd.f32 0.0, %v357
        %v359 = vpop.f32.mrb[0].mxu0
        %v360 = vpop.f32.mrb[0].mxu0
        %v361 = vadd.f32 0.0, %v360
        %v362 = vpop.f32.mrb[0].mxu0
        %363 = vmatprep.mubr.bf16.mxu0 0
        %364 = vmatmul.mubr.bf16.gmra.mrb[0].mxu0 %v307
        %v365 = vpop.f32.mrb[0].mxu0
        %v366 = vadd.f32 0.0, %v365
        %v367 = vpop.f32.mrb[0].mxu0
        %v368 = vpop.f32.mrb[0].mxu0
        %v369 = vadd.f32 0.0, %v368
        %v370 = vpop.f32.mrb[0].mxu0
        %371 = vmatprep.mubr.bf16.mxu0 0
        %372 = vmatmul.mubr.bf16.gmra.mrb[0].mxu0 %v310
        %v373 = vpop.f32.mrb[0].mxu0
        %v374 = vadd.f32 0.0, %v373
        %v375 = vpop.f32.mrb[0].mxu0
        %v376 = vpop.f32.mrb[0].mxu0
        %v377 = vadd.f32 0.0, %v376
        %v378 = vpop.f32.mrb[0].mxu0
        %379 = vdwg.mxu0
        %v380 = vadd.f32 %v278, %v350
        %v381 = vadd.f32 %v279, %v353
        %v382 = vadd.f32 %v280, %v358
        %v383 = vadd.f32 %v281, %v361
        %v384 = vadd.f32 %v282, %v366
        %v385 = vadd.f32 %v283, %v369
        %v386 = vadd.f32 %v284, %v374
        %v387 = vadd.f32 %v285, %v377
        %s388 = scalar_lea.vmem %s172, 16
        %v389 = vld [vmem:[%s388] sm:$0xff]
        %v390 = vld [vmem:[%s388 + $0x10] sm:$0xff]
        %v391 = vld [vmem:[%s388 + $0x20] sm:$0xff]
        %v392 = vld [vmem:[%s388 + $0x30] sm:$0xff]
        %v393 = vld [vmem:[%s388 + $0x40] sm:$0xff]
        %v394 = vld [vmem:[%s388 + $0x50] sm:$0xff]
        %v395 = vld [vmem:[%s388 + $0x60] sm:$0xff]
        %v396 = vld [vmem:[%s388 + $0x70] sm:$0xff]
        %v397 = vpack.c.bf16 %v390, %v389
        %v398 = vpack.c.bf16 %v392, %v391
        %v399 = vpack.c.bf16 %v394, %v393
        %v400 = vpack.c.bf16 %v396, %v395
        %s401 = scalar_lea.vmem %s1, 16
        %v402 = vld [vmem:[%s401] sm:$0x3]
        %v404 = vsel %vm196, %v397, 0
        %v407 = vsel %vm196, %v398, 0
        %v410 = vsel %vm196, %v399, 0
        %v413 = vsel %vm196, %v400, 0
        %v416 = vsel %vm209, %v402, 0
        %418 = vmatprep.subr.bf16.mxu0 0
        %419 = vmatpush1.bf16.msra.mxu0 %v416
        %420 = vmatprep.subr.bf16.mxu0 0
        %421 = vmatpush1.bf16.msra.mxu0 0
        %422 = vmatprep.subr.bf16.mxu0 0
        %423 = vmatpush1.bf16.msra.mxu0 0
        %424 = vmatprep.subr.bf16.mxu0 0
        %425 = vmatpush1.bf16.msra.mxu0 0
        %426 = vmatprep.subr.bf16.mxu0 0
        %427 = vmatpush1.bf16.msra.mxu0 0
        %428 = vmatprep.subr.bf16.mxu0 0
        %429 = vmatpush1.bf16.msra.mxu0 0
        %430 = vmatprep.subr.bf16.mxu0 0
        %431 = vmatpush1.bf16.msra.mxu0 0
        %432 = vmatprep.subr.bf16.mxu0 0
        %433 = vmatpush1.bf16.msra.mxu0 0
        %434 = vmatprep.subr.bf16.mxu0 0
        %435 = vmatpush1.bf16.msra.mxu0 0
        %436 = vmatprep.subr.bf16.mxu0 0
        %437 = vmatpush1.bf16.msra.mxu0 0
        %438 = vmatprep.subr.bf16.mxu0 0
        %439 = vmatpush1.bf16.msra.mxu0 0
        %440 = vmatprep.subr.bf16.mxu0 0
        %441 = vmatpush1.bf16.msra.mxu0 0
        %442 = vmatprep.subr.bf16.mxu0 0
        %443 = vmatpush1.bf16.msra.mxu0 0
        %444 = vmatprep.subr.bf16.mxu0 0
        %445 = vmatpush1.bf16.msra.mxu0 0
        %446 = vmatprep.subr.bf16.mxu0 0
        %447 = vmatpush1.bf16.msra.mxu0 0
        %448 = vmatprep.subr.bf16.mxu0 0
        %449 = vmatpush1.bf16.msra.mxu0 0
        %450 = vmatprep.mubr.bf16.mxu0 0
        %451 = vmatmul.mubr.bf16.gmra.mrb[0].mxu0 %v404
        %v452 = vpop.f32.mrb[0].mxu0
        %v453 = vadd.f32 0.0, %v452
        %v454 = vpop.f32.mrb[0].mxu0
        %v455 = vpop.f32.mrb[0].mxu0
        %v456 = vadd.f32 0.0, %v455
        %v457 = vpop.f32.mrb[0].mxu0
        %458 = vmatprep.mubr.bf16.mxu0 0
        %459 = vmatmul.mubr.bf16.gmra.mrb[0].mxu0 %v407
        %v460 = vpop.f32.mrb[0].mxu0
        %v461 = vadd.f32 0.0, %v460
        %v462 = vpop.f32.mrb[0].mxu0
        %v463 = vpop.f32.mrb[0].mxu0
        %v464 = vadd.f32 0.0, %v463
        %v465 = vpop.f32.mrb[0].mxu0
        %466 = vmatprep.mubr.bf16.mxu0 0
        %467 = vmatmul.mubr.bf16.gmra.mrb[0].mxu0 %v410
        %v468 = vpop.f32.mrb[0].mxu0
        %v469 = vadd.f32 0.0, %v468
        %v470 = vpop.f32.mrb[0].mxu0
        %v471 = vpop.f32.mrb[0].mxu0
        %v472 = vadd.f32 0.0, %v471
        %v473 = vpop.f32.mrb[0].mxu0
        %474 = vmatprep.mubr.bf16.mxu0 0
        %475 = vmatmul.mubr.bf16.gmra.mrb[0].mxu0 %v413
        %v476 = vpop.f32.mrb[0].mxu0
        %v477 = vadd.f32 0.0, %v476
        %v478 = vpop.f32.mrb[0].mxu0
        %v479 = vpop.f32.mrb[0].mxu0
        %v480 = vadd.f32 0.0, %v479
        %v481 = vpop.f32.mrb[0].mxu0
        %482 = vdwg.mxu0
        %v483 = vadd.f32 %v380, %v453
        %v484 = vadd.f32 %v381, %v456
        %v485 = vadd.f32 %v382, %v461
        %v486 = vadd.f32 %v383, %v464
        %v487 = vadd.f32 %v384, %v469
        %v488 = vadd.f32 %v385, %v472
        %v489 = vadd.f32 %v386, %v477
        %v490 = vadd.f32 %v387, %v480
        %v491 = vld [vmem:[%s388 + $0x1] sm:$0xff]
        %v492 = vld [vmem:[%s388 + $0x11] sm:$0xff]
        %v493 = vld [vmem:[%s388 + $0x21] sm:$0xff]
        %v494 = vld [vmem:[%s388 + $0x31] sm:$0xff]
        %v495 = vld [vmem:[%s388 + $0x41] sm:$0xff]
        %v496 = vld [vmem:[%s388 + $0x51] sm:$0xff]
        %v497 = vld [vmem:[%s388 + $0x61] sm:$0xff]
        %v498 = vld [vmem:[%s388 + $0x71] sm:$0xff]
        %v499 = vpack.c.bf16 %v492, %v491
        %v500 = vpack.c.bf16 %v494, %v493
        %v501 = vpack.c.bf16 %v496, %v495
        %v502 = vpack.c.bf16 %v498, %v497
        %s503 = scalar_lea.vmem %s1, 20
        %v504 = vld [vmem:[%s503] sm:$0x3]
        %v506 = vsel %vm196, %v499, 0
        %v509 = vsel %vm196, %v500, 0
        %v512 = vsel %vm196, %v501, 0
        %v515 = vsel %vm196, %v502, 0
        %v518 = vsel %vm209, %v504, 0
        %520 = vmatprep.subr.bf16.mxu0 0
        %521 = vmatpush1.bf16.msra.mxu0 %v518
        %522 = vmatprep.subr.bf16.mxu0 0
        %523 = vmatpush1.bf16.msra.mxu0 0
        %524 = vmatprep.subr.bf16.mxu0 0
        %525 = vmatpush1.bf16.msra.mxu0 0
        %526 = vmatprep.subr.bf16.mxu0 0
        %527 = vmatpush1.bf16.msra.mxu0 0
        %528 = vmatprep.subr.bf16.mxu0 0
        %529 = vmatpush1.bf16.msra.mxu0 0
        %530 = vmatprep.subr.bf16.mxu0 0
        %531 = vmatpush1.bf16.msra.mxu0 0
        %532 = vmatprep.subr.bf16.mxu0 0
        %533 = vmatpush1.bf16.msra.mxu0 0
        %534 = vmatprep.subr.bf16.mxu0 0
        %535 = vmatpush1.bf16.msra.mxu0 0
        %536 = vmatprep.subr.bf16.mxu0 0
        %537 = vmatpush1.bf16.msra.mxu0 0
        %538 = vmatprep.subr.bf16.mxu0 0
        %539 = vmatpush1.bf16.msra.mxu0 0
        %540 = vmatprep.subr.bf16.mxu0 0
        %541 = vmatpush1.bf16.msra.mxu0 0
        %542 = vmatprep.subr.bf16.mxu0 0
        %543 = vmatpush1.bf16.msra.mxu0 0
        %544 = vmatprep.subr.bf16.mxu0 0
        %545 = vmatpush1.bf16.msra.mxu0 0
        %546 = vmatprep.subr.bf16.mxu0 0
        %547 = vmatpush1.bf16.msra.mxu0 0
        %548 = vmatprep.subr.bf16.mxu0 0
        %549 = vmatpush1.bf16.msra.mxu0 0
        %550 = vmatprep.subr.bf16.mxu0 0
        %551 = vmatpush1.bf16.msra.mxu0 0
        %552 = vmatprep.mubr.bf16.mxu0 0
        %553 = vmatmul.mubr.bf16.gmra.mrb[0].mxu0 %v506
        %v554 = vpop.f32.mrb[0].mxu0
        %v555 = vadd.f32 0.0, %v554
        %v556 = vpop.f32.mrb[0].mxu0
        %v557 = vpop.f32.mrb[0].mxu0
        %v558 = vadd.f32 0.0, %v557
        %v559 = vpop.f32.mrb[0].mxu0
        %560 = vmatprep.mubr.bf16.mxu0 0
        %561 = vmatmul.mubr.bf16.gmra.mrb[0].mxu0 %v509
        %v562 = vpop.f32.mrb[0].mxu0
        %v563 = vadd.f32 0.0, %v562
        %v564 = vpop.f32.mrb[0].mxu0
        %v565 = vpop.f32.mrb[0].mxu0
        %v566 = vadd.f32 0.0, %v565
        %v567 = vpop.f32.mrb[0].mxu0
        %568 = vmatprep.mubr.bf16.mxu0 0
        %569 = vmatmul.mubr.bf16.gmra.mrb[0].mxu0 %v512
        %v570 = vpop.f32.mrb[0].mxu0
        %v571 = vadd.f32 0.0, %v570
        %v572 = vpop.f32.mrb[0].mxu0
        %v573 = vpop.f32.mrb[0].mxu0
        %v574 = vadd.f32 0.0, %v573
        %v575 = vpop.f32.mrb[0].mxu0
        %576 = vmatprep.mubr.bf16.mxu0 0
        %577 = vmatmul.mubr.bf16.gmra.mrb[0].mxu0 %v515
        %v578 = vpop.f32.mrb[0].mxu0
        %v579 = vadd.f32 0.0, %v578
        %v580 = vpop.f32.mrb[0].mxu0
        %v581 = vpop.f32.mrb[0].mxu0
        %v582 = vadd.f32 0.0, %v581
        %v583 = vpop.f32.mrb[0].mxu0
        %584 = vdwg.mxu0
        %v585 = vadd.f32 %v483, %v555
        %v586 = vadd.f32 %v484, %v558
        %v587 = vadd.f32 %v485, %v563
        %v588 = vadd.f32 %v486, %v566
        %v589 = vadd.f32 %v487, %v571
        %v590 = vadd.f32 %v488, %v574
        %v591 = vadd.f32 %v489, %v579
        %v592 = vadd.f32 %v490, %v582
        %s593 = scalar_lea.vmem %s172, 144
        %v594 = vld [vmem:[%s593] sm:$0xff]
        %v595 = vld [vmem:[%s593 + $0x10] sm:$0xff]
        %v596 = vld [vmem:[%s593 + $0x20] sm:$0xff]
        %v597 = vld [vmem:[%s593 + $0x30] sm:$0xff]
        %v598 = vld [vmem:[%s593 + $0x40] sm:$0xff]
        %v599 = vld [vmem:[%s593 + $0x50] sm:$0xff]
        %v600 = vld [vmem:[%s593 + $0x60] sm:$0xff]
        %v601 = vld [vmem:[%s593 + $0x70] sm:$0xff]
        %v602 = vpack.c.bf16 %v595, %v594
        %v603 = vpack.c.bf16 %v597, %v596
        %v604 = vpack.c.bf16 %v599, %v598
        %v605 = vpack.c.bf16 %v601, %v600
        %s606 = scalar_lea.vmem %s1, 2
        %v607 = vld [vmem:[%s606] sm:$0x3]
        %v609 = vsel %vm196, %v602, 0
        %v612 = vsel %vm196, %v603, 0
        %v615 = vsel %vm196, %v604, 0
        %v618 = vsel %vm196, %v605, 0
        %v621 = vsel %vm209, %v607, 0
        %623 = vmatprep.subr.bf16.mxu0 0
        %624 = vmatpush1.bf16.msra.mxu0 %v621
        %625 = vmatprep.subr.bf16.mxu0 0
        %626 = vmatpush1.bf16.msra.mxu0 0
        %627 = vmatprep.subr.bf16.mxu0 0
        %628 = vmatpush1.bf16.msra.mxu0 0
        %629 = vmatprep.subr.bf16.mxu0 0
        %630 = vmatpush1.bf16.msra.mxu0 0
        %631 = vmatprep.subr.bf16.mxu0 0
        %632 = vmatpush1.bf16.msra.mxu0 0
        %633 = vmatprep.subr.bf16.mxu0 0
        %634 = vmatpush1.bf16.msra.mxu0 0
        %635 = vmatprep.subr.bf16.mxu0 0
        %636 = vmatpush1.bf16.msra.mxu0 0
        %637 = vmatprep.subr.bf16.mxu0 0
        %638 = vmatpush1.bf16.msra.mxu0 0
        %639 = vmatprep.subr.bf16.mxu0 0
        %640 = vmatpush1.bf16.msra.mxu0 0
        %641 = vmatprep.subr.bf16.mxu0 0
        %642 = vmatpush1.bf16.msra.mxu0 0
        %643 = vmatprep.subr.bf16.mxu0 0
        %644 = vmatpush1.bf16.msra.mxu0 0
        %645 = vmatprep.subr.bf16.mxu0 0
        %646 = vmatpush1.bf16.msra.mxu0 0
        %647 = vmatprep.subr.bf16.mxu0 0
        %648 = vmatpush1.bf16.msra.mxu0 0
        %649 = vmatprep.subr.bf16.mxu0 0
        %650 = vmatpush1.bf16.msra.mxu0 0
        %651 = vmatprep.subr.bf16.mxu0 0
        %652 = vmatpush1.bf16.msra.mxu0 0
        %653 = vmatprep.subr.bf16.mxu0 0
        %654 = vmatpush1.bf16.msra.mxu0 0
        %655 = vmatprep.mubr.bf16.mxu0 0
        %656 = vmatmul.mubr.bf16.gmra.mrb[0].mxu0 %v609
        %v657 = vpop.f32.mrb[0].mxu0
        %v658 = vadd.f32 0.0, %v657
        %v659 = vpop.f32.mrb[0].mxu0
        %v660 = vpop.f32.mrb[0].mxu0
        %v661 = vadd.f32 0.0, %v660
        %v662 = vpop.f32.mrb[0].mxu0
        %663 = vmatprep.mubr.bf16.mxu0 0
        %664 = vmatmul.mubr.bf16.gmra.mrb[0].mxu0 %v612
        %v665 = vpop.f32.mrb[0].mxu0
        %v666 = vadd.f32 0.0, %v665
        %v667 = vpop.f32.mrb[0].mxu0
        %v668 = vpop.f32.mrb[0].mxu0
        %v669 = vadd.f32 0.0, %v668
        %v670 = vpop.f32.mrb[0].mxu0
        %671 = vmatprep.mubr.bf16.mxu0 0
        %672 = vmatmul.mubr.bf16.gmra.mrb[0].mxu0 %v615
        %v673 = vpop.f32.mrb[0].mxu0
        %v674 = vadd.f32 0.0, %v673
        %v675 = vpop.f32.mrb[0].mxu0
        %v676 = vpop.f32.mrb[0].mxu0
        %v677 = vadd.f32 0.0, %v676
        %v678 = vpop.f32.mrb[0].mxu0
        %679 = vmatprep.mubr.bf16.mxu0 0
        %680 = vmatmul.mubr.bf16.gmra.mrb[0].mxu0 %v618
        %v681 = vpop.f32.mrb[0].mxu0
        %v682 = vadd.f32 0.0, %v681
        %v683 = vpop.f32.mrb[0].mxu0
        %v684 = vpop.f32.mrb[0].mxu0
        %v685 = vadd.f32 0.0, %v684
        %v686 = vpop.f32.mrb[0].mxu0
        %687 = vdwg.mxu0
        %v688 = vadd.f32 %v585, %v658
        %v689 = vadd.f32 %v586, %v661
        %v690 = vadd.f32 %v587, %v666
        %v691 = vadd.f32 %v588, %v669
        %v692 = vadd.f32 %v589, %v674
        %v693 = vadd.f32 %v590, %v677
        %v694 = vadd.f32 %v591, %v682
        %v695 = vadd.f32 %v592, %v685
        %v696 = vld [vmem:[%s593 + $0x1] sm:$0xff]
        %v697 = vld [vmem:[%s593 + $0x11] sm:$0xff]
        %v698 = vld [vmem:[%s593 + $0x21] sm:$0xff]
        %v699 = vld [vmem:[%s593 + $0x31] sm:$0xff]
        %v700 = vld [vmem:[%s593 + $0x41] sm:$0xff]
        %v701 = vld [vmem:[%s593 + $0x51] sm:$0xff]
        %v702 = vld [vmem:[%s593 + $0x61] sm:$0xff]
        %v703 = vld [vmem:[%s593 + $0x71] sm:$0xff]
        %v704 = vpack.c.bf16 %v697, %v696
        %v705 = vpack.c.bf16 %v699, %v698
        %v706 = vpack.c.bf16 %v701, %v700
        %v707 = vpack.c.bf16 %v703, %v702
        %s708 = scalar_lea.vmem %s1, 6
        %v709 = vld [vmem:[%s708] sm:$0x3]
        %v711 = vsel %vm196, %v704, 0
        %v714 = vsel %vm196, %v705, 0
        %v717 = vsel %vm196, %v706, 0
        %v720 = vsel %vm196, %v707, 0
        %v723 = vsel %vm209, %v709, 0
        %725 = vmatprep.subr.bf16.mxu0 0
        %726 = vmatpush1.bf16.msra.mxu0 %v723
        %727 = vmatprep.subr.bf16.mxu0 0
        %728 = vmatpush1.bf16.msra.mxu0 0
        %729 = vmatprep.subr.bf16.mxu0 0
        %730 = vmatpush1.bf16.msra.mxu0 0
        %731 = vmatprep.subr.bf16.mxu0 0
        %732 = vmatpush1.bf16.msra.mxu0 0
        %733 = vmatprep.subr.bf16.mxu0 0
        %734 = vmatpush1.bf16.msra.mxu0 0
        %735 = vmatprep.subr.bf16.mxu0 0
        %736 = vmatpush1.bf16.msra.mxu0 0
        %737 = vmatprep.subr.bf16.mxu0 0
        %738 = vmatpush1.bf16.msra.mxu0 0
        %739 = vmatprep.subr.bf16.mxu0 0
        %740 = vmatpush1.bf16.msra.mxu0 0
        %741 = vmatprep.subr.bf16.mxu0 0
        %742 = vmatpush1.bf16.msra.mxu0 0
        %743 = vmatprep.subr.bf16.mxu0 0
        %744 = vmatpush1.bf16.msra.mxu0 0
        %745 = vmatprep.subr.bf16.mxu0 0
        %746 = vmatpush1.bf16.msra.mxu0 0
        %747 = vmatprep.subr.bf16.mxu0 0
        %748 = vmatpush1.bf16.msra.mxu0 0
        %749 = vmatprep.subr.bf16.mxu0 0
        %750 = vmatpush1.bf16.msra.mxu0 0
        %751 = vmatprep.subr.bf16.mxu0 0
        %752 = vmatpush1.bf16.msra.mxu0 0
        %753 = vmatprep.subr.bf16.mxu0 0
        %754 = vmatpush1.bf16.msra.mxu0 0
        %755 = vmatprep.subr.bf16.mxu0 0
        %756 = vmatpush1.bf16.msra.mxu0 0
        %757 = vmatprep.mubr.bf16.mxu0 0
        %758 = vmatmul.mubr.bf16.gmra.mrb[0].mxu0 %v711
        %v759 = vpop.f32.mrb[0].mxu0
        %v760 = vadd.f32 0.0, %v759
        %v761 = vpop.f32.mrb[0].mxu0
        %v762 = vpop.f32.mrb[0].mxu0
        %v763 = vadd.f32 0.0, %v762
        %v764 = vpop.f32.mrb[0].mxu0
        %765 = vmatprep.mubr.bf16.mxu0 0
        %766 = vmatmul.mubr.bf16.gmra.mrb[0].mxu0 %v714
        %v767 = vpop.f32.mrb[0].mxu0
        %v768 = vadd.f32 0.0, %v767
        %v769 = vpop.f32.mrb[0].mxu0
        %v770 = vpop.f32.mrb[0].mxu0
        %v771 = vadd.f32 0.0, %v770
        %v772 = vpop.f32.mrb[0].mxu0
        %773 = vmatprep.mubr.bf16.mxu0 0
        %774 = vmatmul.mubr.bf16.gmra.mrb[0].mxu0 %v717
        %v775 = vpop.f32.mrb[0].mxu0
        %v776 = vadd.f32 0.0, %v775
        %v777 = vpop.f32.mrb[0].mxu0
        %v778 = vpop.f32.mrb[0].mxu0
        %v779 = vadd.f32 0.0, %v778
        %v780 = vpop.f32.mrb[0].mxu0
        %781 = vmatprep.mubr.bf16.mxu0 0
        %782 = vmatmul.mubr.bf16.gmra.mrb[0].mxu0 %v720
        %v783 = vpop.f32.mrb[0].mxu0
        %v784 = vadd.f32 0.0, %v783
        %v785 = vpop.f32.mrb[0].mxu0
        %v786 = vpop.f32.mrb[0].mxu0
        %v787 = vadd.f32 0.0, %v786
        %v788 = vpop.f32.mrb[0].mxu0
        %789 = vdwg.mxu0
        %v790 = vadd.f32 %v688, %v760
        %v791 = vadd.f32 %v689, %v763
        %v792 = vadd.f32 %v690, %v768
        %v793 = vadd.f32 %v691, %v771
        %v794 = vadd.f32 %v692, %v776
        %v795 = vadd.f32 %v693, %v779
        %v796 = vadd.f32 %v694, %v784
        %v797 = vadd.f32 %v695, %v787
        %s798 = scalar_lea.vmem %s172, 160
        %v799 = vld [vmem:[%s798] sm:$0xff]
        %v800 = vld [vmem:[%s798 + $0x10] sm:$0xff]
        %v801 = vld [vmem:[%s798 + $0x20] sm:$0xff]
        %v802 = vld [vmem:[%s798 + $0x30] sm:$0xff]
        %v803 = vld [vmem:[%s798 + $0x40] sm:$0xff]
        %v804 = vld [vmem:[%s798 + $0x50] sm:$0xff]
        %v805 = vld [vmem:[%s798 + $0x60] sm:$0xff]
        %v806 = vld [vmem:[%s798 + $0x70] sm:$0xff]
        %v807 = vpack.c.bf16 %v800, %v799
        %v808 = vpack.c.bf16 %v802, %v801
        %v809 = vpack.c.bf16 %v804, %v803
        %v810 = vpack.c.bf16 %v806, %v805
        %s811 = scalar_lea.vmem %s1, 18
        %v812 = vld [vmem:[%s811] sm:$0x3]
        %v814 = vsel %vm196, %v807, 0
        %v817 = vsel %vm196, %v808, 0
        %v820 = vsel %vm196, %v809, 0
        %v823 = vsel %vm196, %v810, 0
        %v826 = vsel %vm209, %v812, 0
        %828 = vmatprep.subr.bf16.mxu0 0
        %829 = vmatpush1.bf16.msra.mxu0 %v826
        %830 = vmatprep.subr.bf16.mxu0 0
        %831 = vmatpush1.bf16.msra.mxu0 0
        %832 = vmatprep.subr.bf16.mxu0 0
        %833 = vmatpush1.bf16.msra.mxu0 0
        %834 = vmatprep.subr.bf16.mxu0 0
        %835 = vmatpush1.bf16.msra.mxu0 0
        %836 = vmatprep.subr.bf16.mxu0 0
        %837 = vmatpush1.bf16.msra.mxu0 0
        %838 = vmatprep.subr.bf16.mxu0 0
        %839 = vmatpush1.bf16.msra.mxu0 0
        %840 = vmatprep.subr.bf16.mxu0 0
        %841 = vmatpush1.bf16.msra.mxu0 0
        %842 = vmatprep.subr.bf16.mxu0 0
        %843 = vmatpush1.bf16.msra.mxu0 0
        %844 = vmatprep.subr.bf16.mxu0 0
        %845 = vmatpush1.bf16.msra.mxu0 0
        %846 = vmatprep.subr.bf16.mxu0 0
        %847 = vmatpush1.bf16.msra.mxu0 0
        %848 = vmatprep.subr.bf16.mxu0 0
        %849 = vmatpush1.bf16.msra.mxu0 0
        %850 = vmatprep.subr.bf16.mxu0 0
        %851 = vmatpush1.bf16.msra.mxu0 0
        %852 = vmatprep.subr.bf16.mxu0 0
        %853 = vmatpush1.bf16.msra.mxu0 0
        %854 = vmatprep.subr.bf16.mxu0 0
        %855 = vmatpush1.bf16.msra.mxu0 0
        %856 = vmatprep.subr.bf16.mxu0 0
        %857 = vmatpush1.bf16.msra.mxu0 0
        %858 = vmatprep.subr.bf16.mxu0 0
        %859 = vmatpush1.bf16.msra.mxu0 0
        %860 = vmatprep.mubr.bf16.mxu0 0
        %861 = vmatmul.mubr.bf16.gmra.mrb[0].mxu0 %v814
        %v862 = vpop.f32.mrb[0].mxu0
        %v863 = vadd.f32 0.0, %v862
        %v864 = vpop.f32.mrb[0].mxu0
        %v865 = vpop.f32.mrb[0].mxu0
        %v866 = vadd.f32 0.0, %v865
        %v867 = vpop.f32.mrb[0].mxu0
        %868 = vmatprep.mubr.bf16.mxu0 0
        %869 = vmatmul.mubr.bf16.gmra.mrb[0].mxu0 %v817
        %v870 = vpop.f32.mrb[0].mxu0
        %v871 = vadd.f32 0.0, %v870
        %v872 = vpop.f32.mrb[0].mxu0
        %v873 = vpop.f32.mrb[0].mxu0
        %v874 = vadd.f32 0.0, %v873
        %v875 = vpop.f32.mrb[0].mxu0
        %876 = vmatprep.mubr.bf16.mxu0 0
        %877 = vmatmul.mubr.bf16.gmra.mrb[0].mxu0 %v820
        %v878 = vpop.f32.mrb[0].mxu0
        %v879 = vadd.f32 0.0, %v878
        %v880 = vpop.f32.mrb[0].mxu0
        %v881 = vpop.f32.mrb[0].mxu0
        %v882 = vadd.f32 0.0, %v881
        %v883 = vpop.f32.mrb[0].mxu0
        %884 = vmatprep.mubr.bf16.mxu0 0
        %885 = vmatmul.mubr.bf16.gmra.mrb[0].mxu0 %v823
        %v886 = vpop.f32.mrb[0].mxu0
        %v887 = vadd.f32 0.0, %v886
        %v888 = vpop.f32.mrb[0].mxu0
        %v889 = vpop.f32.mrb[0].mxu0
        %v890 = vadd.f32 0.0, %v889
        %v891 = vpop.f32.mrb[0].mxu0
        %892 = vdwg.mxu0
        %v893 = vadd.f32 %v790, %v863
        %v894 = vadd.f32 %v791, %v866
        %v895 = vadd.f32 %v792, %v871
        %v896 = vadd.f32 %v793, %v874
        %v897 = vadd.f32 %v794, %v879
        %v898 = vadd.f32 %v795, %v882
        %v899 = vadd.f32 %v796, %v887
        %v900 = vadd.f32 %v797, %v890
        %v901 = vld [vmem:[%s798 + $0x1] sm:$0xff]
        %v902 = vld [vmem:[%s798 + $0x11] sm:$0xff]
        %v903 = vld [vmem:[%s798 + $0x21] sm:$0xff]
        %v904 = vld [vmem:[%s798 + $0x31] sm:$0xff]
        %v905 = vld [vmem:[%s798 + $0x41] sm:$0xff]
        %v906 = vld [vmem:[%s798 + $0x51] sm:$0xff]
        %v907 = vld [vmem:[%s798 + $0x61] sm:$0xff]
        %v908 = vld [vmem:[%s798 + $0x71] sm:$0xff]
        %v909 = vpack.c.bf16 %v902, %v901
        %v910 = vpack.c.bf16 %v904, %v903
        %v911 = vpack.c.bf16 %v906, %v905
        %v912 = vpack.c.bf16 %v908, %v907
        %s913 = scalar_lea.vmem %s1, 22
        %v914 = vld [vmem:[%s913] sm:$0x3]
        %v916 = vsel %vm196, %v909, 0
        %v919 = vsel %vm196, %v910, 0
        %v922 = vsel %vm196, %v911, 0
        %v925 = vsel %vm196, %v912, 0
        %v928 = vsel %vm209, %v914, 0
        %930 = vmatprep.subr.bf16.mxu0 0
        %931 = vmatpush1.bf16.msra.mxu0 %v928
        %932 = vmatprep.subr.bf16.mxu0 0
        %933 = vmatpush1.bf16.msra.mxu0 0
        %934 = vmatprep.subr.bf16.mxu0 0
        %935 = vmatpush1.bf16.msra.mxu0 0
        %936 = vmatprep.subr.bf16.mxu0 0
        %937 = vmatpush1.bf16.msra.mxu0 0
        %938 = vmatprep.subr.bf16.mxu0 0
        %939 = vmatpush1.bf16.msra.mxu0 0
        %940 = vmatprep.subr.bf16.mxu0 0
        %941 = vmatpush1.bf16.msra.mxu0 0
        %942 = vmatprep.subr.bf16.mxu0 0
        %943 = vmatpush1.bf16.msra.mxu0 0
        %944 = vmatprep.subr.bf16.mxu0 0
        %945 = vmatpush1.bf16.msra.mxu0 0
        %946 = vmatprep.subr.bf16.mxu0 0
        %947 = vmatpush1.bf16.msra.mxu0 0
        %948 = vmatprep.subr.bf16.mxu0 0
        %949 = vmatpush1.bf16.msra.mxu0 0
        %950 = vmatprep.subr.bf16.mxu0 0
        %951 = vmatpush1.bf16.msra.mxu0 0
        %952 = vmatprep.subr.bf16.mxu0 0
        %953 = vmatpush1.bf16.msra.mxu0 0
        %954 = vmatprep.subr.bf16.mxu0 0
        %955 = vmatpush1.bf16.msra.mxu0 0
        %956 = vmatprep.subr.bf16.mxu0 0
        %957 = vmatpush1.bf16.msra.mxu0 0
        %958 = vmatprep.subr.bf16.mxu0 0
        %959 = vmatpush1.bf16.msra.mxu0 0
        %960 = vmatprep.subr.bf16.mxu0 0
        %961 = vmatpush1.bf16.msra.mxu0 0
        %962 = vmatprep.mubr.bf16.mxu0 0
        %963 = vmatmul.mubr.bf16.gmra.mrb[0].mxu0 %v916
        %v964 = vpop.f32.mrb[0].mxu0
        %v965 = vadd.f32 0.0, %v964
        %v966 = vpop.f32.mrb[0].mxu0
        %v967 = vpop.f32.mrb[0].mxu0
        %v968 = vadd.f32 0.0, %v967
        %v969 = vpop.f32.mrb[0].mxu0
        %970 = vmatprep.mubr.bf16.mxu0 0
        %971 = vmatmul.mubr.bf16.gmra.mrb[0].mxu0 %v919
        %v972 = vpop.f32.mrb[0].mxu0
        %v973 = vadd.f32 0.0, %v972
        %v974 = vpop.f32.mrb[0].mxu0
        %v975 = vpop.f32.mrb[0].mxu0
        %v976 = vadd.f32 0.0, %v975
        %v977 = vpop.f32.mrb[0].mxu0
        %978 = vmatprep.mubr.bf16.mxu0 0
        %979 = vmatmul.mubr.bf16.gmra.mrb[0].mxu0 %v922
        %v980 = vpop.f32.mrb[0].mxu0
        %v981 = vadd.f32 0.0, %v980
        %v982 = vpop.f32.mrb[0].mxu0
        %v983 = vpop.f32.mrb[0].mxu0
        %v984 = vadd.f32 0.0, %v983
        %v985 = vpop.f32.mrb[0].mxu0
        %986 = vmatprep.mubr.bf16.mxu0 0
        %987 = vmatmul.mubr.bf16.gmra.mrb[0].mxu0 %v925
        %v988 = vpop.f32.mrb[0].mxu0
        %v989 = vadd.f32 0.0, %v988
        %v990 = vpop.f32.mrb[0].mxu0
        %v991 = vpop.f32.mrb[0].mxu0
        %v992 = vadd.f32 0.0, %v991
        %v993 = vpop.f32.mrb[0].mxu0
        %994 = vdwg.mxu0
        %v995 = vadd.f32 %v893, %v965
        %v996 = vadd.f32 %v894, %v968
        %v997 = vadd.f32 %v895, %v973
        %v998 = vadd.f32 %v896, %v976
        %v999 = vadd.f32 %v897, %v981
        %v1000 = vadd.f32 %v898, %v984
        %v1001 = vadd.f32 %v899, %v989
        %v1002 = vadd.f32 %v900, %v992
        %s1003 = scalar_lea.vmem %s172, 288
        %v1004 = vld [vmem:[%s1003] sm:$0xff]
        %v1005 = vld [vmem:[%s1003 + $0x10] sm:$0xff]
        %v1006 = vld [vmem:[%s1003 + $0x20] sm:$0xff]
        %v1007 = vld [vmem:[%s1003 + $0x30] sm:$0xff]
        %v1008 = vld [vmem:[%s1003 + $0x40] sm:$0xff]
        %v1009 = vld [vmem:[%s1003 + $0x50] sm:$0xff]
        %v1010 = vld [vmem:[%s1003 + $0x60] sm:$0xff]
        %v1011 = vld [vmem:[%s1003 + $0x70] sm:$0xff]
        %v1012 = vpack.c.bf16 %v1005, %v1004
        %v1013 = vpack.c.bf16 %v1007, %v1006
        %v1014 = vpack.c.bf16 %v1009, %v1008
        %v1015 = vpack.c.bf16 %v1011, %v1010
        %s1016 = scalar_lea.vmem %s1, 8
        %v1017 = vld [vmem:[%s1016] sm:$0x3]
        %v1019 = vsel %vm196, %v1012, 0
        %v1022 = vsel %vm196, %v1013, 0
        %v1025 = vsel %vm196, %v1014, 0
        %v1028 = vsel %vm196, %v1015, 0
        %v1031 = vsel %vm209, %v1017, 0
        %1033 = vmatprep.subr.bf16.mxu0 0
        %1034 = vmatpush1.bf16.msra.mxu0 %v1031
        %1035 = vmatprep.subr.bf16.mxu0 0
        %1036 = vmatpush1.bf16.msra.mxu0 0
        %1037 = vmatprep.subr.bf16.mxu0 0
        %1038 = vmatpush1.bf16.msra.mxu0 0
        %1039 = vmatprep.subr.bf16.mxu0 0
        %1040 = vmatpush1.bf16.msra.mxu0 0
        %1041 = vmatprep.subr.bf16.mxu0 0
        %1042 = vmatpush1.bf16.msra.mxu0 0
        %1043 = vmatprep.subr.bf16.mxu0 0
        %1044 = vmatpush1.bf16.msra.mxu0 0
        %1045 = vmatprep.subr.bf16.mxu0 0
        %1046 = vmatpush1.bf16.msra.mxu0 0
        %1047 = vmatprep.subr.bf16.mxu0 0
        %1048 = vmatpush1.bf16.msra.mxu0 0
        %1049 = vmatprep.subr.bf16.mxu0 0
        %1050 = vmatpush1.bf16.msra.mxu0 0
        %1051 = vmatprep.subr.bf16.mxu0 0
        %1052 = vmatpush1.bf16.msra.mxu0 0
        %1053 = vmatprep.subr.bf16.mxu0 0
        %1054 = vmatpush1.bf16.msra.mxu0 0
        %1055 = vmatprep.subr.bf16.mxu0 0
        %1056 = vmatpush1.bf16.msra.mxu0 0
        %1057 = vmatprep.subr.bf16.mxu0 0
        %1058 = vmatpush1.bf16.msra.mxu0 0
        %1059 = vmatprep.subr.bf16.mxu0 0
        %1060 = vmatpush1.bf16.msra.mxu0 0
        %1061 = vmatprep.subr.bf16.mxu0 0
        %1062 = vmatpush1.bf16.msra.mxu0 0
        %1063 = vmatprep.subr.bf16.mxu0 0
        %1064 = vmatpush1.bf16.msra.mxu0 0
        %1065 = vmatprep.mubr.bf16.mxu0 0
        %1066 = vmatmul.mubr.bf16.gmra.mrb[0].mxu0 %v1019
        %v1067 = vpop.f32.mrb[0].mxu0
        %v1068 = vadd.f32 0.0, %v1067
        %v1069 = vpop.f32.mrb[0].mxu0
        %v1070 = vpop.f32.mrb[0].mxu0
        %v1071 = vadd.f32 0.0, %v1070
        %v1072 = vpop.f32.mrb[0].mxu0
        %1073 = vmatprep.mubr.bf16.mxu0 0
        %1074 = vmatmul.mubr.bf16.gmra.mrb[0].mxu0 %v1022
        %v1075 = vpop.f32.mrb[0].mxu0
        %v1076 = vadd.f32 0.0, %v1075
        %v1077 = vpop.f32.mrb[0].mxu0
        %v1078 = vpop.f32.mrb[0].mxu0
        %v1079 = vadd.f32 0.0, %v1078
        %v1080 = vpop.f32.mrb[0].mxu0
        %1081 = vmatprep.mubr.bf16.mxu0 0
        %1082 = vmatmul.mubr.bf16.gmra.mrb[0].mxu0 %v1025
        %v1083 = vpop.f32.mrb[0].mxu0
        %v1084 = vadd.f32 0.0, %v1083
        %v1085 = vpop.f32.mrb[0].mxu0
        %v1086 = vpop.f32.mrb[0].mxu0
        %v1087 = vadd.f32 0.0, %v1086
        %v1088 = vpop.f32.mrb[0].mxu0
        %1089 = vmatprep.mubr.bf16.mxu0 0
        %1090 = vmatmul.mubr.bf16.gmra.mrb[0].mxu0 %v1028
        %v1091 = vpop.f32.mrb[0].mxu0
        %v1092 = vadd.f32 0.0, %v1091
        %v1093 = vpop.f32.mrb[0].mxu0
        %v1094 = vpop.f32.mrb[0].mxu0
        %v1095 = vadd.f32 0.0, %v1094
        %v1096 = vpop.f32.mrb[0].mxu0
        %1097 = vdwg.mxu0
        %v1098 = vadd.f32 %v995, %v1068
        %v1099 = vadd.f32 %v996, %v1071
        %v1100 = vadd.f32 %v997, %v1076
        %v1101 = vadd.f32 %v998, %v1079
        %v1102 = vadd.f32 %v999, %v1084
        %v1103 = vadd.f32 %v1000, %v1087
        %v1104 = vadd.f32 %v1001, %v1092
        %v1105 = vadd.f32 %v1002, %v1095
        %v1106 = vld [vmem:[%s1003 + $0x1] sm:$0xff]
        %v1107 = vld [vmem:[%s1003 + $0x11] sm:$0xff]
        %v1108 = vld [vmem:[%s1003 + $0x21] sm:$0xff]
        %v1109 = vld [vmem:[%s1003 + $0x31] sm:$0xff]
        %v1110 = vld [vmem:[%s1003 + $0x41] sm:$0xff]
        %v1111 = vld [vmem:[%s1003 + $0x51] sm:$0xff]
        %v1112 = vld [vmem:[%s1003 + $0x61] sm:$0xff]
        %v1113 = vld [vmem:[%s1003 + $0x71] sm:$0xff]
        %v1114 = vpack.c.bf16 %v1107, %v1106
        %v1115 = vpack.c.bf16 %v1109, %v1108
        %v1116 = vpack.c.bf16 %v1111, %v1110
        %v1117 = vpack.c.bf16 %v1113, %v1112
        %s1118 = scalar_lea.vmem %s1, 12
        %v1119 = vld [vmem:[%s1118] sm:$0x3]
        %v1121 = vsel %vm196, %v1114, 0
        %v1124 = vsel %vm196, %v1115, 0
        %v1127 = vsel %vm196, %v1116, 0
        %v1130 = vsel %vm196, %v1117, 0
        %v1133 = vsel %vm209, %v1119, 0
        %1135 = vmatprep.subr.bf16.mxu0 0
        %1136 = vmatpush1.bf16.msra.mxu0 %v1133
        %1137 = vmatprep.subr.bf16.mxu0 0
        %1138 = vmatpush1.bf16.msra.mxu0 0
        %1139 = vmatprep.subr.bf16.mxu0 0
        %1140 = vmatpush1.bf16.msra.mxu0 0
        %1141 = vmatprep.subr.bf16.mxu0 0
        %1142 = vmatpush1.bf16.msra.mxu0 0
        %1143 = vmatprep.subr.bf16.mxu0 0
        %1144 = vmatpush1.bf16.msra.mxu0 0
        %1145 = vmatprep.subr.bf16.mxu0 0
        %1146 = vmatpush1.bf16.msra.mxu0 0
        %1147 = vmatprep.subr.bf16.mxu0 0
        %1148 = vmatpush1.bf16.msra.mxu0 0
        %1149 = vmatprep.subr.bf16.mxu0 0
        %1150 = vmatpush1.bf16.msra.mxu0 0
        %1151 = vmatprep.subr.bf16.mxu0 0
        %1152 = vmatpush1.bf16.msra.mxu0 0
        %1153 = vmatprep.subr.bf16.mxu0 0
        %1154 = vmatpush1.bf16.msra.mxu0 0
        %1155 = vmatprep.subr.bf16.mxu0 0
        %1156 = vmatpush1.bf16.msra.mxu0 0
        %1157 = vmatprep.subr.bf16.mxu0 0
        %1158 = vmatpush1.bf16.msra.mxu0 0
        %1159 = vmatprep.subr.bf16.mxu0 0
        %1160 = vmatpush1.bf16.msra.mxu0 0
        %1161 = vmatprep.subr.bf16.mxu0 0
        %1162 = vmatpush1.bf16.msra.mxu0 0
        %1163 = vmatprep.subr.bf16.mxu0 0
        %1164 = vmatpush1.bf16.msra.mxu0 0
        %1165 = vmatprep.subr.bf16.mxu0 0
        %1166 = vmatpush1.bf16.msra.mxu0 0
        %1167 = vmatprep.mubr.bf16.mxu0 0
        %1168 = vmatmul.mubr.bf16.gmra.mrb[0].mxu0 %v1121
        %v1169 = vpop.f32.mrb[0].mxu0
        %v1170 = vadd.f32 0.0, %v1169
        %v1171 = vpop.f32.mrb[0].mxu0
        %v1172 = vpop.f32.mrb[0].mxu0
        %v1173 = vadd.f32 0.0, %v1172
        %v1174 = vpop.f32.mrb[0].mxu0
        %1175 = vmatprep.mubr.bf16.mxu0 0
        %1176 = vmatmul.mubr.bf16.gmra.mrb[0].mxu0 %v1124
        %v1177 = vpop.f32.mrb[0].mxu0
        %v1178 = vadd.f32 0.0, %v1177
        %v1179 = vpop.f32.mrb[0].mxu0
        %v1180 = vpop.f32.mrb[0].mxu0
        %v1181 = vadd.f32 0.0, %v1180
        %v1182 = vpop.f32.mrb[0].mxu0
        %1183 = vmatprep.mubr.bf16.mxu0 0
        %1184 = vmatmul.mubr.bf16.gmra.mrb[0].mxu0 %v1127
        %v1185 = vpop.f32.mrb[0].mxu0
        %v1186 = vadd.f32 0.0, %v1185
        %v1187 = vpop.f32.mrb[0].mxu0
        %v1188 = vpop.f32.mrb[0].mxu0
        %v1189 = vadd.f32 0.0, %v1188
        %v1190 = vpop.f32.mrb[0].mxu0
        %1191 = vmatprep.mubr.bf16.mxu0 0
        %1192 = vmatmul.mubr.bf16.gmra.mrb[0].mxu0 %v1130
        %v1193 = vpop.f32.mrb[0].mxu0
        %v1194 = vadd.f32 0.0, %v1193
        %v1195 = vpop.f32.mrb[0].mxu0
        %v1196 = vpop.f32.mrb[0].mxu0
        %v1197 = vadd.f32 0.0, %v1196
        %v1198 = vpop.f32.mrb[0].mxu0
        %1199 = vdwg.mxu0
        %v1200 = vadd.f32 %v1098, %v1170
        %v1201 = vadd.f32 %v1099, %v1173
        %v1202 = vadd.f32 %v1100, %v1178
        %v1203 = vadd.f32 %v1101, %v1181
        %v1204 = vadd.f32 %v1102, %v1186
        %v1205 = vadd.f32 %v1103, %v1189
        %v1206 = vadd.f32 %v1104, %v1194
        %v1207 = vadd.f32 %v1105, %v1197
        %s1208 = scalar_lea.vmem %s172, 304
        %v1209 = vld [vmem:[%s1208] sm:$0xff]
        %v1210 = vld [vmem:[%s1208 + $0x10] sm:$0xff]
        %v1211 = vld [vmem:[%s1208 + $0x20] sm:$0xff]
        %v1212 = vld [vmem:[%s1208 + $0x30] sm:$0xff]
        %v1213 = vld [vmem:[%s1208 + $0x40] sm:$0xff]
        %v1214 = vld [vmem:[%s1208 + $0x50] sm:$0xff]
        %v1215 = vld [vmem:[%s1208 + $0x60] sm:$0xff]
        %v1216 = vld [vmem:[%s1208 + $0x70] sm:$0xff]
        %v1217 = vpack.c.bf16 %v1210, %v1209
        %v1218 = vpack.c.bf16 %v1212, %v1211
        %v1219 = vpack.c.bf16 %v1214, %v1213
        %v1220 = vpack.c.bf16 %v1216, %v1215
        %s1221 = scalar_lea.vmem %s1, 24
        %v1222 = vld [vmem:[%s1221] sm:$0x3]
        %v1224 = vsel %vm196, %v1217, 0
        %v1227 = vsel %vm196, %v1218, 0
        %v1230 = vsel %vm196, %v1219, 0
        %v1233 = vsel %vm196, %v1220, 0
        %v1236 = vsel %vm209, %v1222, 0
        %1238 = vmatprep.subr.bf16.mxu0 0
        %1239 = vmatpush1.bf16.msra.mxu0 %v1236
        %1240 = vmatprep.subr.bf16.mxu0 0
        %1241 = vmatpush1.bf16.msra.mxu0 0
        %1242 = vmatprep.subr.bf16.mxu0 0
        %1243 = vmatpush1.bf16.msra.mxu0 0
        %1244 = vmatprep.subr.bf16.mxu0 0
        %1245 = vmatpush1.bf16.msra.mxu0 0
        %1246 = vmatprep.subr.bf16.mxu0 0
        %1247 = vmatpush1.bf16.msra.mxu0 0
        %1248 = vmatprep.subr.bf16.mxu0 0
        %1249 = vmatpush1.bf16.msra.mxu0 0
        %1250 = vmatprep.subr.bf16.mxu0 0
        %1251 = vmatpush1.bf16.msra.mxu0 0
        %1252 = vmatprep.subr.bf16.mxu0 0
        %1253 = vmatpush1.bf16.msra.mxu0 0
        %1254 = vmatprep.subr.bf16.mxu0 0
        %1255 = vmatpush1.bf16.msra.mxu0 0
        %1256 = vmatprep.subr.bf16.mxu0 0
        %1257 = vmatpush1.bf16.msra.mxu0 0
        %1258 = vmatprep.subr.bf16.mxu0 0
        %1259 = vmatpush1.bf16.msra.mxu0 0
        %1260 = vmatprep.subr.bf16.mxu0 0
        %1261 = vmatpush1.bf16.msra.mxu0 0
        %1262 = vmatprep.subr.bf16.mxu0 0
        %1263 = vmatpush1.bf16.msra.mxu0 0
        %1264 = vmatprep.subr.bf16.mxu0 0
        %1265 = vmatpush1.bf16.msra.mxu0 0
        %1266 = vmatprep.subr.bf16.mxu0 0
        %1267 = vmatpush1.bf16.msra.mxu0 0
        %1268 = vmatprep.subr.bf16.mxu0 0
        %1269 = vmatpush1.bf16.msra.mxu0 0
        %1270 = vmatprep.mubr.bf16.mxu0 0
        %1271 = vmatmul.mubr.bf16.gmra.mrb[0].mxu0 %v1224
        %v1272 = vpop.f32.mrb[0].mxu0
        %v1273 = vadd.f32 0.0, %v1272
        %v1274 = vpop.f32.mrb[0].mxu0
        %v1275 = vpop.f32.mrb[0].mxu0
        %v1276 = vadd.f32 0.0, %v1275
        %v1277 = vpop.f32.mrb[0].mxu0
        %1278 = vmatprep.mubr.bf16.mxu0 0
        %1279 = vmatmul.mubr.bf16.gmra.mrb[0].mxu0 %v1227
        %v1280 = vpop.f32.mrb[0].mxu0
        %v1281 = vadd.f32 0.0, %v1280
        %v1282 = vpop.f32.mrb[0].mxu0
        %v1283 = vpop.f32.mrb[0].mxu0
        %v1284 = vadd.f32 0.0, %v1283
        %v1285 = vpop.f32.mrb[0].mxu0
        %1286 = vmatprep.mubr.bf16.mxu0 0
        %1287 = vmatmul.mubr.bf16.gmra.mrb[0].mxu0 %v1230
        %v1288 = vpop.f32.mrb[0].mxu0
        %v1289 = vadd.f32 0.0, %v1288
        %v1290 = vpop.f32.mrb[0].mxu0
        %v1291 = vpop.f32.mrb[0].mxu0
        %v1292 = vadd.f32 0.0, %v1291
        %v1293 = vpop.f32.mrb[0].mxu0
        %1294 = vmatprep.mubr.bf16.mxu0 0
        %1295 = vmatmul.mubr.bf16.gmra.mrb[0].mxu0 %v1233
        %v1296 = vpop.f32.mrb[0].mxu0
        %v1297 = vadd.f32 0.0, %v1296
        %v1298 = vpop.f32.mrb[0].mxu0
        %v1299 = vpop.f32.mrb[0].mxu0
        %v1300 = vadd.f32 0.0, %v1299
        %v1301 = vpop.f32.mrb[0].mxu0
        %1302 = vdwg.mxu0
        %v1303 = vadd.f32 %v1200, %v1273
        %v1304 = vadd.f32 %v1201, %v1276
        %v1305 = vadd.f32 %v1202, %v1281
        %v1306 = vadd.f32 %v1203, %v1284
        %v1307 = vadd.f32 %v1204, %v1289
        %v1308 = vadd.f32 %v1205, %v1292
        %v1309 = vadd.f32 %v1206, %v1297
        %v1310 = vadd.f32 %v1207, %v1300
        %v1311 = vld [vmem:[%s1208 + $0x1] sm:$0xff]
        %v1312 = vld [vmem:[%s1208 + $0x11] sm:$0xff]
        %v1313 = vld [vmem:[%s1208 + $0x21] sm:$0xff]
        %v1314 = vld [vmem:[%s1208 + $0x31] sm:$0xff]
        %v1315 = vld [vmem:[%s1208 + $0x41] sm:$0xff]
        %v1316 = vld [vmem:[%s1208 + $0x51] sm:$0xff]
        %v1317 = vld [vmem:[%s1208 + $0x61] sm:$0xff]
        %v1318 = vld [vmem:[%s1208 + $0x71] sm:$0xff]
        %v1319 = vpack.c.bf16 %v1312, %v1311
        %v1320 = vpack.c.bf16 %v1314, %v1313
        %v1321 = vpack.c.bf16 %v1316, %v1315
        %v1322 = vpack.c.bf16 %v1318, %v1317
        %s1323 = scalar_lea.vmem %s1, 28
        %v1324 = vld [vmem:[%s1323] sm:$0x3]
        %v1326 = vsel %vm196, %v1319, 0
        %v1329 = vsel %vm196, %v1320, 0
        %v1332 = vsel %vm196, %v1321, 0
        %v1335 = vsel %vm196, %v1322, 0
        %v1338 = vsel %vm209, %v1324, 0
        %1340 = vmatprep.subr.bf16.mxu0 0
        %1341 = vmatpush1.bf16.msra.mxu0 %v1338
        %1342 = vmatprep.subr.bf16.mxu0 0
        %1343 = vmatpush1.bf16.msra.mxu0 0
        %1344 = vmatprep.subr.bf16.mxu0 0
        %1345 = vmatpush1.bf16.msra.mxu0 0
        %1346 = vmatprep.subr.bf16.mxu0 0
        %1347 = vmatpush1.bf16.msra.mxu0 0
        %1348 = vmatprep.subr.bf16.mxu0 0
        %1349 = vmatpush1.bf16.msra.mxu0 0
        %1350 = vmatprep.subr.bf16.mxu0 0
        %1351 = vmatpush1.bf16.msra.mxu0 0
        %1352 = vmatprep.subr.bf16.mxu0 0
        %1353 = vmatpush1.bf16.msra.mxu0 0
        %1354 = vmatprep.subr.bf16.mxu0 0
        %1355 = vmatpush1.bf16.msra.mxu0 0
        %1356 = vmatprep.subr.bf16.mxu0 0
        %1357 = vmatpush1.bf16.msra.mxu0 0
        %1358 = vmatprep.subr.bf16.mxu0 0
        %1359 = vmatpush1.bf16.msra.mxu0 0
        %1360 = vmatprep.subr.bf16.mxu0 0
        %1361 = vmatpush1.bf16.msra.mxu0 0
        %1362 = vmatprep.subr.bf16.mxu0 0
        %1363 = vmatpush1.bf16.msra.mxu0 0
        %1364 = vmatprep.subr.bf16.mxu0 0
        %1365 = vmatpush1.bf16.msra.mxu0 0
        %1366 = vmatprep.subr.bf16.mxu0 0
        %1367 = vmatpush1.bf16.msra.mxu0 0
        %1368 = vmatprep.subr.bf16.mxu0 0
        %1369 = vmatpush1.bf16.msra.mxu0 0
        %1370 = vmatprep.subr.bf16.mxu0 0
        %1371 = vmatpush1.bf16.msra.mxu0 0
        %1372 = vmatprep.mubr.bf16.mxu0 0
        %1373 = vmatmul.mubr.bf16.gmra.mrb[0].mxu0 %v1326
        %v1374 = vpop.f32.mrb[0].mxu0
        %v1375 = vadd.f32 0.0, %v1374
        %v1376 = vpop.f32.mrb[0].mxu0
        %v1377 = vpop.f32.mrb[0].mxu0
        %v1378 = vadd.f32 0.0, %v1377
        %v1379 = vpop.f32.mrb[0].mxu0
        %1380 = vmatprep.mubr.bf16.mxu0 0
        %1381 = vmatmul.mubr.bf16.gmra.mrb[0].mxu0 %v1329
        %v1382 = vpop.f32.mrb[0].mxu0
        %v1383 = vadd.f32 0.0, %v1382
        %v1384 = vpop.f32.mrb[0].mxu0
        %v1385 = vpop.f32.mrb[0].mxu0
        %v1386 = vadd.f32 0.0, %v1385
        %v1387 = vpop.f32.mrb[0].mxu0
        %1388 = vmatprep.mubr.bf16.mxu0 0
        %1389 = vmatmul.mubr.bf16.gmra.mrb[0].mxu0 %v1332
        %v1390 = vpop.f32.mrb[0].mxu0
        %v1391 = vadd.f32 0.0, %v1390
        %v1392 = vpop.f32.mrb[0].mxu0
        %v1393 = vpop.f32.mrb[0].mxu0
        %v1394 = vadd.f32 0.0, %v1393
        %v1395 = vpop.f32.mrb[0].mxu0
        %1396 = vmatprep.mubr.bf16.mxu0 0
        %1397 = vmatmul.mubr.bf16.gmra.mrb[0].mxu0 %v1335
        %v1398 = vpop.f32.mrb[0].mxu0
        %v1399 = vadd.f32 0.0, %v1398
        %v1400 = vpop.f32.mrb[0].mxu0
        %v1401 = vpop.f32.mrb[0].mxu0
        %v1402 = vadd.f32 0.0, %v1401
        %v1403 = vpop.f32.mrb[0].mxu0
        %1404 = vdwg.mxu0
        %v1405 = vadd.f32 %v1303, %v1375
        %v1406 = vadd.f32 %v1304, %v1378
        %v1407 = vadd.f32 %v1305, %v1383
        %v1408 = vadd.f32 %v1306, %v1386
        %v1409 = vadd.f32 %v1307, %v1391
        %v1410 = vadd.f32 %v1308, %v1394
        %v1411 = vadd.f32 %v1309, %v1399
        %v1412 = vadd.f32 %v1310, %v1402
        %s1413 = scalar_lea.vmem %s172, 432
        %v1414 = vld [vmem:[%s1413] sm:$0xff]
        %v1415 = vld [vmem:[%s1413 + $0x10] sm:$0xff]
        %v1416 = vld [vmem:[%s1413 + $0x20] sm:$0xff]
        %v1417 = vld [vmem:[%s1413 + $0x30] sm:$0xff]
        %v1418 = vld [vmem:[%s1413 + $0x40] sm:$0xff]
        %v1419 = vld [vmem:[%s1413 + $0x50] sm:$0xff]
        %v1420 = vld [vmem:[%s1413 + $0x60] sm:$0xff]
        %v1421 = vld [vmem:[%s1413 + $0x70] sm:$0xff]
        %v1422 = vpack.c.bf16 %v1415, %v1414
        %v1423 = vpack.c.bf16 %v1417, %v1416
        %v1424 = vpack.c.bf16 %v1419, %v1418
        %v1425 = vpack.c.bf16 %v1421, %v1420
        %s1426 = scalar_lea.vmem %s1, 10
        %v1427 = vld [vmem:[%s1426] sm:$0x3]
        %v1429 = vsel %vm196, %v1422, 0
        %v1432 = vsel %vm196, %v1423, 0
        %v1435 = vsel %vm196, %v1424, 0
        %v1438 = vsel %vm196, %v1425, 0
        %v1441 = vsel %vm209, %v1427, 0
        %1443 = vmatprep.subr.bf16.mxu0 0
        %1444 = vmatpush1.bf16.msra.mxu0 %v1441
        %1445 = vmatprep.subr.bf16.mxu0 0
        %1446 = vmatpush1.bf16.msra.mxu0 0
        %1447 = vmatprep.subr.bf16.mxu0 0
        %1448 = vmatpush1.bf16.msra.mxu0 0
        %1449 = vmatprep.subr.bf16.mxu0 0
        %1450 = vmatpush1.bf16.msra.mxu0 0
        %1451 = vmatprep.subr.bf16.mxu0 0
        %1452 = vmatpush1.bf16.msra.mxu0 0
        %1453 = vmatprep.subr.bf16.mxu0 0
        %1454 = vmatpush1.bf16.msra.mxu0 0
        %1455 = vmatprep.subr.bf16.mxu0 0
        %1456 = vmatpush1.bf16.msra.mxu0 0
        %1457 = vmatprep.subr.bf16.mxu0 0
        %1458 = vmatpush1.bf16.msra.mxu0 0
        %1459 = vmatprep.subr.bf16.mxu0 0
        %1460 = vmatpush1.bf16.msra.mxu0 0
        %1461 = vmatprep.subr.bf16.mxu0 0
        %1462 = vmatpush1.bf16.msra.mxu0 0
        %1463 = vmatprep.subr.bf16.mxu0 0
        %1464 = vmatpush1.bf16.msra.mxu0 0
        %1465 = vmatprep.subr.bf16.mxu0 0
        %1466 = vmatpush1.bf16.msra.mxu0 0
        %1467 = vmatprep.subr.bf16.mxu0 0
        %1468 = vmatpush1.bf16.msra.mxu0 0
        %1469 = vmatprep.subr.bf16.mxu0 0
        %1470 = vmatpush1.bf16.msra.mxu0 0
        %1471 = vmatprep.subr.bf16.mxu0 0
        %1472 = vmatpush1.bf16.msra.mxu0 0
        %1473 = vmatprep.subr.bf16.mxu0 0
        %1474 = vmatpush1.bf16.msra.mxu0 0
        %1475 = vmatprep.mubr.bf16.mxu0 0
        %1476 = vmatmul.mubr.bf16.gmra.mrb[0].mxu0 %v1429
        %v1477 = vpop.f32.mrb[0].mxu0
        %v1478 = vadd.f32 0.0, %v1477
        %v1479 = vpop.f32.mrb[0].mxu0
        %v1480 = vpop.f32.mrb[0].mxu0
        %v1481 = vadd.f32 0.0, %v1480
        %v1482 = vpop.f32.mrb[0].mxu0
        %1483 = vmatprep.mubr.bf16.mxu0 0
        %1484 = vmatmul.mubr.bf16.gmra.mrb[0].mxu0 %v1432
        %v1485 = vpop.f32.mrb[0].mxu0
        %v1486 = vadd.f32 0.0, %v1485
        %v1487 = vpop.f32.mrb[0].mxu0
        %v1488 = vpop.f32.mrb[0].mxu0
        %v1489 = vadd.f32 0.0, %v1488
        %v1490 = vpop.f32.mrb[0].mxu0
        %1491 = vmatprep.mubr.bf16.mxu0 0
        %1492 = vmatmul.mubr.bf16.gmra.mrb[0].mxu0 %v1435
        %v1493 = vpop.f32.mrb[0].mxu0
        %v1494 = vadd.f32 0.0, %v1493
        %v1495 = vpop.f32.mrb[0].mxu0
        %v1496 = vpop.f32.mrb[0].mxu0
        %v1497 = vadd.f32 0.0, %v1496
        %v1498 = vpop.f32.mrb[0].mxu0
        %1499 = vmatprep.mubr.bf16.mxu0 0
        %1500 = vmatmul.mubr.bf16.gmra.mrb[0].mxu0 %v1438
        %v1501 = vpop.f32.mrb[0].mxu0
        %v1502 = vadd.f32 0.0, %v1501
        %v1503 = vpop.f32.mrb[0].mxu0
        %v1504 = vpop.f32.mrb[0].mxu0
        %v1505 = vadd.f32 0.0, %v1504
        %v1506 = vpop.f32.mrb[0].mxu0
        %1507 = vdwg.mxu0
        %v1508 = vadd.f32 %v1405, %v1478
        %v1509 = vadd.f32 %v1406, %v1481
        %v1510 = vadd.f32 %v1407, %v1486
        %v1511 = vadd.f32 %v1408, %v1489
        %v1512 = vadd.f32 %v1409, %v1494
        %v1513 = vadd.f32 %v1410, %v1497
        %v1514 = vadd.f32 %v1411, %v1502
        %v1515 = vadd.f32 %v1412, %v1505
        %v1516 = vld [vmem:[%s1413 + $0x1] sm:$0xff]
        %v1517 = vld [vmem:[%s1413 + $0x11] sm:$0xff]
        %v1518 = vld [vmem:[%s1413 + $0x21] sm:$0xff]
        %v1519 = vld [vmem:[%s1413 + $0x31] sm:$0xff]
        %v1520 = vld [vmem:[%s1413 + $0x41] sm:$0xff]
        %v1521 = vld [vmem:[%s1413 + $0x51] sm:$0xff]
        %v1522 = vld [vmem:[%s1413 + $0x61] sm:$0xff]
        %v1523 = vld [vmem:[%s1413 + $0x71] sm:$0xff]
        %v1524 = vpack.c.bf16 %v1517, %v1516
        %v1525 = vpack.c.bf16 %v1519, %v1518
        %v1526 = vpack.c.bf16 %v1521, %v1520
        %v1527 = vpack.c.bf16 %v1523, %v1522
        %s1528 = scalar_lea.vmem %s1, 14
        %v1529 = vld [vmem:[%s1528] sm:$0x3]
        %v1531 = vsel %vm196, %v1524, 0
        %v1534 = vsel %vm196, %v1525, 0
        %v1537 = vsel %vm196, %v1526, 0
        %v1540 = vsel %vm196, %v1527, 0
        %v1543 = vsel %vm209, %v1529, 0
        %1545 = vmatprep.subr.bf16.mxu0 0
        %1546 = vmatpush1.bf16.msra.mxu0 %v1543
        %1547 = vmatprep.subr.bf16.mxu0 0
        %1548 = vmatpush1.bf16.msra.mxu0 0
        %1549 = vmatprep.subr.bf16.mxu0 0
        %1550 = vmatpush1.bf16.msra.mxu0 0
        %1551 = vmatprep.subr.bf16.mxu0 0
        %1552 = vmatpush1.bf16.msra.mxu0 0
        %1553 = vmatprep.subr.bf16.mxu0 0
        %1554 = vmatpush1.bf16.msra.mxu0 0
        %1555 = vmatprep.subr.bf16.mxu0 0
        %1556 = vmatpush1.bf16.msra.mxu0 0
        %1557 = vmatprep.subr.bf16.mxu0 0
        %1558 = vmatpush1.bf16.msra.mxu0 0
        %1559 = vmatprep.subr.bf16.mxu0 0
        %1560 = vmatpush1.bf16.msra.mxu0 0
        %1561 = vmatprep.subr.bf16.mxu0 0
        %1562 = vmatpush1.bf16.msra.mxu0 0
        %1563 = vmatprep.subr.bf16.mxu0 0
        %1564 = vmatpush1.bf16.msra.mxu0 0
        %1565 = vmatprep.subr.bf16.mxu0 0
        %1566 = vmatpush1.bf16.msra.mxu0 0
        %1567 = vmatprep.subr.bf16.mxu0 0
        %1568 = vmatpush1.bf16.msra.mxu0 0
        %1569 = vmatprep.subr.bf16.mxu0 0
        %1570 = vmatpush1.bf16.msra.mxu0 0
        %1571 = vmatprep.subr.bf16.mxu0 0
        %1572 = vmatpush1.bf16.msra.mxu0 0
        %1573 = vmatprep.subr.bf16.mxu0 0
        %1574 = vmatpush1.bf16.msra.mxu0 0
        %1575 = vmatprep.subr.bf16.mxu0 0
        %1576 = vmatpush1.bf16.msra.mxu0 0
        %1577 = vmatprep.mubr.bf16.mxu0 0
        %1578 = vmatmul.mubr.bf16.gmra.mrb[0].mxu0 %v1531
        %v1579 = vpop.f32.mrb[0].mxu0
        %v1580 = vadd.f32 0.0, %v1579
        %v1581 = vpop.f32.mrb[0].mxu0
        %v1582 = vpop.f32.mrb[0].mxu0
        %v1583 = vadd.f32 0.0, %v1582
        %v1584 = vpop.f32.mrb[0].mxu0
        %1585 = vmatprep.mubr.bf16.mxu0 0
        %1586 = vmatmul.mubr.bf16.gmra.mrb[0].mxu0 %v1534
        %v1587 = vpop.f32.mrb[0].mxu0
        %v1588 = vadd.f32 0.0, %v1587
        %v1589 = vpop.f32.mrb[0].mxu0
        %v1590 = vpop.f32.mrb[0].mxu0
        %v1591 = vadd.f32 0.0, %v1590
        %v1592 = vpop.f32.mrb[0].mxu0
        %1593 = vmatprep.mubr.bf16.mxu0 0
        %1594 = vmatmul.mubr.bf16.gmra.mrb[0].mxu0 %v1537
        %v1595 = vpop.f32.mrb[0].mxu0
        %v1596 = vadd.f32 0.0, %v1595
        %v1597 = vpop.f32.mrb[0].mxu0
        %v1598 = vpop.f32.mrb[0].mxu0
        %v1599 = vadd.f32 0.0, %v1598
        %v1600 = vpop.f32.mrb[0].mxu0
        %1601 = vmatprep.mubr.bf16.mxu0 0
        %1602 = vmatmul.mubr.bf16.gmra.mrb[0].mxu0 %v1540
        %v1603 = vpop.f32.mrb[0].mxu0
        %v1604 = vadd.f32 0.0, %v1603
        %v1605 = vpop.f32.mrb[0].mxu0
        %v1606 = vpop.f32.mrb[0].mxu0
        %v1607 = vadd.f32 0.0, %v1606
        %v1608 = vpop.f32.mrb[0].mxu0
        %1609 = vdwg.mxu0
        %v1610 = vadd.f32 %v1508, %v1580
        %v1611 = vadd.f32 %v1509, %v1583
        %v1612 = vadd.f32 %v1510, %v1588
        %v1613 = vadd.f32 %v1511, %v1591
        %v1614 = vadd.f32 %v1512, %v1596
        %v1615 = vadd.f32 %v1513, %v1599
        %v1616 = vadd.f32 %v1514, %v1604
        %v1617 = vadd.f32 %v1515, %v1607
        %s1618 = scalar_lea.vmem %s172, 448
        %v1619 = vld [vmem:[%s1618] sm:$0xff]
        %v1620 = vld [vmem:[%s1618 + $0x10] sm:$0xff]
        %v1621 = vld [vmem:[%s1618 + $0x20] sm:$0xff]
        %v1622 = vld [vmem:[%s1618 + $0x30] sm:$0xff]
        %v1623 = vld [vmem:[%s1618 + $0x40] sm:$0xff]
        %v1624 = vld [vmem:[%s1618 + $0x50] sm:$0xff]
        %v1625 = vld [vmem:[%s1618 + $0x60] sm:$0xff]
        %v1626 = vld [vmem:[%s1618 + $0x70] sm:$0xff]
        %v1627 = vpack.c.bf16 %v1620, %v1619
        %v1628 = vpack.c.bf16 %v1622, %v1621
        %v1629 = vpack.c.bf16 %v1624, %v1623
        %v1630 = vpack.c.bf16 %v1626, %v1625
        %s1631 = scalar_lea.vmem %s1, 26
        %v1632 = vld [vmem:[%s1631] sm:$0x3]
        %v1634 = vsel %vm196, %v1627, 0
        %v1637 = vsel %vm196, %v1628, 0
        %v1640 = vsel %vm196, %v1629, 0
        %v1643 = vsel %vm196, %v1630, 0
        %v1646 = vsel %vm209, %v1632, 0
        %1648 = vmatprep.subr.bf16.mxu0 0
        %1649 = vmatpush1.bf16.msra.mxu0 %v1646
        %1650 = vmatprep.subr.bf16.mxu0 0
        %1651 = vmatpush1.bf16.msra.mxu0 0
        %1652 = vmatprep.subr.bf16.mxu0 0
        %1653 = vmatpush1.bf16.msra.mxu0 0
        %1654 = vmatprep.subr.bf16.mxu0 0
        %1655 = vmatpush1.bf16.msra.mxu0 0
        %1656 = vmatprep.subr.bf16.mxu0 0
        %1657 = vmatpush1.bf16.msra.mxu0 0
        %1658 = vmatprep.subr.bf16.mxu0 0
        %1659 = vmatpush1.bf16.msra.mxu0 0
        %1660 = vmatprep.subr.bf16.mxu0 0
        %1661 = vmatpush1.bf16.msra.mxu0 0
        %1662 = vmatprep.subr.bf16.mxu0 0
        %1663 = vmatpush1.bf16.msra.mxu0 0
        %1664 = vmatprep.subr.bf16.mxu0 0
        %1665 = vmatpush1.bf16.msra.mxu0 0
        %1666 = vmatprep.subr.bf16.mxu0 0
        %1667 = vmatpush1.bf16.msra.mxu0 0
        %1668 = vmatprep.subr.bf16.mxu0 0
        %1669 = vmatpush1.bf16.msra.mxu0 0
        %1670 = vmatprep.subr.bf16.mxu0 0
        %1671 = vmatpush1.bf16.msra.mxu0 0
        %1672 = vmatprep.subr.bf16.mxu0 0
        %1673 = vmatpush1.bf16.msra.mxu0 0
        %1674 = vmatprep.subr.bf16.mxu0 0
        %1675 = vmatpush1.bf16.msra.mxu0 0
        %1676 = vmatprep.subr.bf16.mxu0 0
        %1677 = vmatpush1.bf16.msra.mxu0 0
        %1678 = vmatprep.subr.bf16.mxu0 0
        %1679 = vmatpush1.bf16.msra.mxu0 0
        %1680 = vmatprep.mubr.bf16.mxu0 0
        %1681 = vmatmul.mubr.bf16.gmra.mrb[0].mxu0 %v1634
        %v1682 = vpop.f32.mrb[0].mxu0
        %v1683 = vadd.f32 0.0, %v1682
        %v1684 = vpop.f32.mrb[0].mxu0
        %v1685 = vpop.f32.mrb[0].mxu0
        %v1686 = vadd.f32 0.0, %v1685
        %v1687 = vpop.f32.mrb[0].mxu0
        %1688 = vmatprep.mubr.bf16.mxu0 0
        %1689 = vmatmul.mubr.bf16.gmra.mrb[0].mxu0 %v1637
        %v1690 = vpop.f32.mrb[0].mxu0
        %v1691 = vadd.f32 0.0, %v1690
        %v1692 = vpop.f32.mrb[0].mxu0
        %v1693 = vpop.f32.mrb[0].mxu0
        %v1694 = vadd.f32 0.0, %v1693
        %v1695 = vpop.f32.mrb[0].mxu0
        %1696 = vmatprep.mubr.bf16.mxu0 0
        %1697 = vmatmul.mubr.bf16.gmra.mrb[0].mxu0 %v1640
        %v1698 = vpop.f32.mrb[0].mxu0
        %v1699 = vadd.f32 0.0, %v1698
        %v1700 = vpop.f32.mrb[0].mxu0
        %v1701 = vpop.f32.mrb[0].mxu0
        %v1702 = vadd.f32 0.0, %v1701
        %v1703 = vpop.f32.mrb[0].mxu0
        %1704 = vmatprep.mubr.bf16.mxu0 0
        %1705 = vmatmul.mubr.bf16.gmra.mrb[0].mxu0 %v1643
        %v1706 = vpop.f32.mrb[0].mxu0
        %v1707 = vadd.f32 0.0, %v1706
        %v1708 = vpop.f32.mrb[0].mxu0
        %v1709 = vpop.f32.mrb[0].mxu0
        %v1710 = vadd.f32 0.0, %v1709
        %v1711 = vpop.f32.mrb[0].mxu0
        %1712 = vdwg.mxu0
        %v1713 = vadd.f32 %v1610, %v1683
        %v1714 = vadd.f32 %v1611, %v1686
        %v1715 = vadd.f32 %v1612, %v1691
        %v1716 = vadd.f32 %v1613, %v1694
        %v1717 = vadd.f32 %v1614, %v1699
        %v1718 = vadd.f32 %v1615, %v1702
        %v1719 = vadd.f32 %v1616, %v1707
        %v1720 = vadd.f32 %v1617, %v1710
        %v1721 = vld [vmem:[%s1618 + $0x1] sm:$0xff]
        %v1722 = vld [vmem:[%s1618 + $0x11] sm:$0xff]
        %v1723 = vld [vmem:[%s1618 + $0x21] sm:$0xff]
        %v1724 = vld [vmem:[%s1618 + $0x31] sm:$0xff]
        %v1725 = vld [vmem:[%s1618 + $0x41] sm:$0xff]
        %v1726 = vld [vmem:[%s1618 + $0x51] sm:$0xff]
        %v1727 = vld [vmem:[%s1618 + $0x61] sm:$0xff]
        %v1728 = vld [vmem:[%s1618 + $0x71] sm:$0xff]
        %v1729 = vpack.c.bf16 %v1722, %v1721
        %v1730 = vpack.c.bf16 %v1724, %v1723
        %v1731 = vpack.c.bf16 %v1726, %v1725
        %v1732 = vpack.c.bf16 %v1728, %v1727
        %s1733 = scalar_lea.vmem %s1, 30
        %v1734 = vld [vmem:[%s1733] sm:$0x3]
        %v1736 = vsel %vm196, %v1729, 0
        %v1739 = vsel %vm196, %v1730, 0
        %v1742 = vsel %vm196, %v1731, 0
        %v1745 = vsel %vm196, %v1732, 0
        %v1748 = vsel %vm209, %v1734, 0
        %1750 = vmatprep.subr.bf16.mxu0 0
        %1751 = vmatpush1.bf16.msra.mxu0 %v1748
        %1752 = vmatprep.subr.bf16.mxu0 0
        %1753 = vmatpush1.bf16.msra.mxu0 0
        %1754 = vmatprep.subr.bf16.mxu0 0
        %1755 = vmatpush1.bf16.msra.mxu0 0
        %1756 = vmatprep.subr.bf16.mxu0 0
        %1757 = vmatpush1.bf16.msra.mxu0 0
        %1758 = vmatprep.subr.bf16.mxu0 0
        %1759 = vmatpush1.bf16.msra.mxu0 0
        %1760 = vmatprep.subr.bf16.mxu0 0
        %1761 = vmatpush1.bf16.msra.mxu0 0
        %1762 = vmatprep.subr.bf16.mxu0 0
        %1763 = vmatpush1.bf16.msra.mxu0 0
        %1764 = vmatprep.subr.bf16.mxu0 0
        %1765 = vmatpush1.bf16.msra.mxu0 0
        %1766 = vmatprep.subr.bf16.mxu0 0
        %1767 = vmatpush1.bf16.msra.mxu0 0
        %1768 = vmatprep.subr.bf16.mxu0 0
        %1769 = vmatpush1.bf16.msra.mxu0 0
        %1770 = vmatprep.subr.bf16.mxu0 0
        %1771 = vmatpush1.bf16.msra.mxu0 0
        %1772 = vmatprep.subr.bf16.mxu0 0
        %1773 = vmatpush1.bf16.msra.mxu0 0
        %1774 = vmatprep.subr.bf16.mxu0 0
        %1775 = vmatpush1.bf16.msra.mxu0 0
        %1776 = vmatprep.subr.bf16.mxu0 0
        %1777 = vmatpush1.bf16.msra.mxu0 0
        %1778 = vmatprep.subr.bf16.mxu0 0
        %1779 = vmatpush1.bf16.msra.mxu0 0
        %1780 = vmatprep.subr.bf16.mxu0 0
        %1781 = vmatpush1.bf16.msra.mxu0 0
        %1782 = vmatprep.mubr.bf16.mxu0 0
        %1783 = vmatmul.mubr.bf16.gmra.mrb[0].mxu0 %v1736
        %v1784 = vpop.f32.mrb[0].mxu0
        %v1785 = vadd.f32 0.0, %v1784
        %v1786 = vpop.f32.mrb[0].mxu0
        %v1787 = vpop.f32.mrb[0].mxu0
        %v1788 = vadd.f32 0.0, %v1787
        %v1789 = vpop.f32.mrb[0].mxu0
        %1790 = vmatprep.mubr.bf16.mxu0 0
        %1791 = vmatmul.mubr.bf16.gmra.mrb[0].mxu0 %v1739
        %v1792 = vpop.f32.mrb[0].mxu0
        %v1793 = vadd.f32 0.0, %v1792
        %v1794 = vpop.f32.mrb[0].mxu0
        %v1795 = vpop.f32.mrb[0].mxu0
        %v1796 = vadd.f32 0.0, %v1795
        %v1797 = vpop.f32.mrb[0].mxu0
        %1798 = vmatprep.mubr.bf16.mxu0 0
        %1799 = vmatmul.mubr.bf16.gmra.mrb[0].mxu0 %v1742
        %v1800 = vpop.f32.mrb[0].mxu0
        %v1801 = vadd.f32 0.0, %v1800
        %v1802 = vpop.f32.mrb[0].mxu0
        %v1803 = vpop.f32.mrb[0].mxu0
        %v1804 = vadd.f32 0.0, %v1803
        %v1805 = vpop.f32.mrb[0].mxu0
        %1806 = vmatprep.mubr.bf16.mxu0 0
        %1807 = vmatmul.mubr.bf16.gmra.mrb[0].mxu0 %v1745
        %v1808 = vpop.f32.mrb[0].mxu0
        %v1809 = vadd.f32 0.0, %v1808
        %v1810 = vpop.f32.mrb[0].mxu0
        %v1811 = vpop.f32.mrb[0].mxu0
        %v1812 = vadd.f32 0.0, %v1811
        %v1813 = vpop.f32.mrb[0].mxu0
        %1814 = vdwg.mxu0
        %v1815 = vadd.f32 %v1713, %v1785
        %v1816 = vadd.f32 %v1714, %v1788
        %v1817 = vadd.f32 %v1715, %v1793
        %v1818 = vadd.f32 %v1716, %v1796
        %v1819 = vadd.f32 %v1717, %v1801
        %v1820 = vadd.f32 %v1718, %v1804
        %v1821 = vadd.f32 %v1719, %v1809
        %v1822 = vadd.f32 %v1720, %v1812
        %vm1823 = vcmask 261120
        %1824 = vst.msk [vmem:[%s166] sm:$0xff] %vm1823, %v1815
        %1825 = vst.msk [vmem:[%s166 + $0x8] sm:$0xff] %vm1823, %v1816
        %1826 = vst.msk [vmem:[%s166 + $0x10] sm:$0xff] %vm1823, %v1817
        %1827 = vst.msk [vmem:[%s166 + $0x18] sm:$0xff] %vm1823, %v1818
        %1828 = vst.msk [vmem:[%s166 + $0x20] sm:$0xff] %vm1823, %v1819
        %1829 = vst.msk [vmem:[%s166 + $0x28] sm:$0xff] %vm1823, %v1820
        %1830 = vst.msk [vmem:[%s166 + $0x30] sm:$0xff] %vm1823, %v1821
        %1831 = vst.msk [vmem:[%s166 + $0x38] sm:$0xff] %vm1823, %v1822
        %s1832 = sand.u32 %s93, 1
        %s1833 = scalar_lea.sflag [#allocation3], %s1832
        %s1834 = sand.u32 %s93, 1
        %s1835 = smul.addr %s1834, 64
        %s1836 = scalar_lea.vmem [#allocation2], %s1835
        // Predicated region
        $region33: #{downsample_sr.1} parent=31 // pred_check
          %p1837 = pneg %p103
        $region34: #{downsample_sr.1} parent=31 // pred_check_branch
          %1839 = sbr.rel (%p1837) target = $region36
        $region35: #{downsample_sr.1} parent=31 // pred_region
          %s1840 = smul.u32 8, %s17
          %s1842 = ssub.s32 1024, 1024
          %1843 = vsyncadd %s1833, %s1842
          %s1844 = smul.addr %s1840, 128
          %s1845 = scalar_lea.hbm %s3, %s1844
          %s1846 = sshll.u32 %s1836, 4
          %s1847 = int_to_ptr.vmem [resolvable:$true] %s1846
          %1852 = dma.vmem_to_hbm [thread:$0]  %s1847, 1024, %s1845, %s1833, 128, 128, 8
        $region36: #{downsample_sr.1} parent=31 // pred_fallthru
          _
      $region32: #{downsample_sr.1} parent=5 // pred_fallthru
        _
      %p1853 = scmp.le.s32.totalorder 2, %s12
      // Predicated region
      $region37: #{downsample_sr.1} parent=5 // pred_check
        %p1854 = pneg %p1853
      $region38: #{downsample_sr.1} parent=5 // pred_check_branch
        %1856 = sbr.rel (%p1854) target = $region40
      $region39: #{downsample_sr.1} parent=5 // pred_region
        %s1857 = ssub.s32 %s12, 2
        // Predicated region
        $region41: #{downsample_sr.1} parent=39 // pred_check
          %p1858 = pneg %p109
        $region42: #{downsample_sr.1} parent=39 // pred_check_branch
          %1860 = sbr.rel (%p1858) target = $region44
        $region43: #{downsample_sr.1} parent=39 // pred_region
          %s1861 = sand.u32 %s94, 1
          %s1862 = scalar_lea.sflag [#allocation3], %s1861
          %s1863 = sand.u32 %s94, 1
          %s1864 = smul.addr %s1863, 64
          %s1865 = scalar_lea.vmem [#allocation2], %s1864
          %1866 = dma.done %s1862, 1024
        $region44: #{downsample_sr.1} parent=39 // pred_fallthru
          _
      $region40: #{downsample_sr.1} parent=5 // pred_fallthru
        _
    $region6: #{downsample_sr.1} parent=1 // loop_footer
      %s16 = sadd.s32 1, %s12
    $region7: #{downsample_sr.1} parent=1 // loop_footer_branch
      %11 = sbr.rel target = $region3
    $region8: #{downsample_sr.1} parent=1 // loop_exit
      _
    %1867 = vsyncpa [#allocation3], 1
    %s1868 = scalar_lea.sflag [#allocation3], 1
    %1869 = vsyncpa %s1868, 1

</llo_original>
